<compile_context>
chip_gen: v7x
topology: tpu7x:2x2x1
jax: 0.10.0
libtpu: 0.0.40
codegen_flags: <defaults>
</compile_context>

<pallas_src>
import jax
import jax.numpy as jnp
from jax.experimental import pallas as pl
from jax.experimental.pallas import tpu as pltpu

LANE = 128        # vreg lane width
HID_ALIGN = 256   # fill 256-wide MXU tiles on v6e/v7x (also a lane multiple)


def _round_up(n, m):
    return ((n + m - 1) // m) * m


# ----------------------------------------------------------------------------
# Kernel
# ----------------------------------------------------------------------------
def critic_kernel(xa_ref, w1_ref, b1_ref, w2_ref, b2_ref, w3_ref, b3_ref,
                  out_ref):
    # Layer 1 (fused fc11 + fc12): relu([x|a] @ W1 + (b11 + b12))
    h = jnp.dot(xa_ref[...], w1_ref[...], preferred_element_type=jnp.float32)
    h = jnp.maximum(h + b1_ref[...], 0.0)

    # Layer 2: relu(h @ W2 + b2)
    h2 = jnp.dot(h.astype(jnp.bfloat16), w2_ref[...],
                 preferred_element_type=jnp.float32)
    h2 = jnp.maximum(h2 + b2_ref[...], 0.0)

    # Layer 3: h2 @ W3 + b3   (W3 padded to 128 output lanes; real value in col 0)
    o = jnp.dot(h2.astype(jnp.bfloat16), w3_ref[...],
                preferred_element_type=jnp.float32)
    out_ref[...] = (o + b3_ref[...]).astype(out_ref.dtype)


# ----------------------------------------------------------------------------
# Parameters (PyTorch default nn.Linear init, then fused / padded / bf16-cast)
# ----------------------------------------------------------------------------
def init_linear(key, fan_in, fan_out):
    """U(-1/sqrt(fan_in), 1/sqrt(fan_in)); weight stored as (fan_in, fan_out)."""
    kw, kb = jax.random.split(key)
    bound = 1.0 / jnp.sqrt(jnp.float32(fan_in))
    w = jax.random.uniform(kw, (fan_in, fan_out), jnp.float32, -bound, bound)
    b = jax.random.uniform(kb, (fan_out,), jnp.float32, -bound, bound)
    return w, b


def make_params(key, nb_states, nb_actions, hidden1=400, hidden2=300):
    k11, k12, k2, k3 = jax.random.split(key, 4)
    w11, b11 = init_linear(k11, nb_states, hidden1)   # fc11
    w12, b12 = init_linear(k12, nb_actions, hidden1)  # fc12
    w2, b2 = init_linear(k2, hidden1, hidden2)        # fc2
    w3, b3 = init_linear(k3, hidden2, 1)              # fc3

    in_dim = nb_states + nb_actions
    in_pad = _round_up(in_dim, LANE)
    h1_pad = _round_up(hidden1, HID_ALIGN)
    h2_pad = _round_up(hidden2, HID_ALIGN)
    out_pad = LANE

    def pad2(w, rows, cols):
        return jnp.pad(w, ((0, rows - w.shape[0]), (0, cols - w.shape[1])))

    # Fused layer-1: [x | a] @ vstack(W11, W12) + (b11 + b12)
    w1 = pad2(jnp.concatenate([w11, w12], axis=0), in_pad, h1_pad)
    b1 = jnp.pad(b11 + b12, (0, h1_pad - hidden1)).reshape(1, h1_pad)
    w2p = pad2(w2, h1_pad, h2_pad)
    b2p = jnp.pad(b2, (0, h2_pad - hidden2)).reshape(1, h2_pad)
    w3p = pad2(w3, h2_pad, out_pad)
    b3p = jnp.pad(b3, (0, out_pad - 1)).reshape(1, out_pad)

    params = (w1.astype(jnp.bfloat16), b1,
              w2p.astype(jnp.bfloat16), b2p,
              w3p.astype(jnp.bfloat16), b3p)
    raw = dict(w11=w11, b11=b11, w12=w12, b12=b12, w2=w2, b2=b2, w3=w3, b3=b3)
    dims = dict(nb_states=nb_states, nb_actions=nb_actions,
                in_dim=in_dim, in_pad=in_pad,
                h1_pad=h1_pad, h2_pad=h2_pad, out_pad=out_pad)
    return params, dims, raw


def _prepare_inputs(x, a, dims):
    xa = jnp.concatenate([x, a], axis=1)
    xa = jnp.pad(xa, ((0, 0), (0, dims["in_pad"] - dims["in_dim"])))
    return xa.astype(jnp.bfloat16)


# ----------------------------------------------------------------------------
# Wrapper
# ----------------------------------------------------------------------------
def critic_forward(x, a, params, dims, *, block_b=256):
    """x: (B, nb_states), a: (B, nb_actions) -> (B, 1) float32."""
    w1, b1, w2, b2, w3, b3 = params
    B = x.shape[0]

    xa = _prepare_inputs(x, a, dims)

    # Batch tile: multiple of 8 (sublane), capped at block_b; pad batch to fit.
    tb = min(block_b, _round_up(B, 8))
    b_pad = _round_up(B, tb)
    if b_pad != B:
        xa = jnp.pad(xa, ((0, b_pad - B), (0, 0)))

    in_pad = dims["in_pad"]
    h1_pad = dims["h1_pad"]
    h2_pad = dims["h2_pad"]
    out_pad = dims["out_pad"]

    def resident(shape):
        # Same block for every grid step -> weights/biases stay VMEM-resident.
        return pl.BlockSpec(shape, lambda i: (0, 0))

    grid_spec = pltpu.PrefetchScalarGridSpec(
        num_scalar_prefetch=0,
        grid=(b_pad // tb,),
        in_specs=[
            pl.BlockSpec((tb, in_pad), lambda i: (i, 0)),     # streamed [x|a] tiles
            resident((in_pad, h1_pad)), resident((1, h1_pad)),
            resident((h1_pad, h2_pad)), resident((1, h2_pad)),
            resident((h2_pad, out_pad)), resident((1, out_pad)),
        ],
        out_specs=pl.BlockSpec((tb, out_pad), lambda i: (i, 0)),
    )

    out = pl.pallas_call(
        critic_kernel,
        out_shape=jax.ShapeDtypeStruct((b_pad, out_pad), jnp.float32),
        grid_spec=grid_spec,
        compiler_params=pltpu.CompilerParams(
            dimension_semantics=("parallel",),        # shards batch across TCs (v7x)
            vmem_limit_bytes=32 * 1024 * 1024,        # safe on v5e/v6e/v7x
        ),
    )(xa, w1, b1, w2, b2, w3, b3)

    return out[:B, :1]


# ----------------------------------------------------------------------------
# References
# ----------------------------------------------------------------------------
def reference_forward_bf16(x, a, params, dims):
    """Same fused/padded bf16 math as the kernel, with plain jnp (bit-level ref)."""
    w1, b1, w2, b2, w3, b3 = params
    xa = _prepare_inputs(x, a, dims)
    h = jnp.maximum(
        jnp.dot(xa, w1, preferred_element_type=jnp.float32) + b1, 0.0)
    h2 = jnp.maximum(
        jnp.dot(h.astype(jnp.bfloat16), w2,
                preferred_element_type=jnp.float32) + b2, 0.0)
    o = jnp.dot(h2.astype(jnp.bfloat16), w3,
                preferred_element_type=jnp.float32) + b3
    return o[:, :1]


def reference_forward_f32(x, a, raw):
    """Full-precision reference matching the original PyTorch module."""
    h = jnp.maximum(x @ raw["w11"] + raw["b11"] + a @ raw["w12"] + raw["b12"], 0.0)
    h2 = jnp.maximum(h @ raw["w2"] + raw["b2"], 0.0)
    return h2 @ raw["w3"] + raw["b3"]


if __name__ == "__main__":
    key = jax.random.PRNGKey(0)
    k_params, k_x, k_a = jax.random.split(key, 3)

    batch = 8
    nb_states = 16
    nb_actions = 4

    params, dims, raw = make_params(k_params, nb_states, nb_actions,
                                    hidden1=400, hidden2=300)
    x = jax.random.normal(k_x, (batch, nb_states), jnp.float32)
    a = jax.random.normal(k_a, (batch, nb_actions), jnp.float32)

    out = critic_forward(x, a, params, dims)
    out = jax.block_until_ready(out)
    assert out.shape == (batch, 1)

    # Tight check against an identical-precision (bf16) reference.
    ref_bf16 = reference_forward_bf16(x, a, params, dims)
    assert jnp.allclose(out, ref_bf16, atol=5e-3, rtol=5e-3)

    # Loose check against the full-f32 PyTorch-equivalent forward.
    ref_f32 = reference_forward_f32(x, a, raw)
    assert jnp.allclose(out, ref_f32, atol=5e-2, rtol=5e-2)

    print("KERNEL_OK")
</pallas_src>

<mosaic_0001>
module attributes {stable_mosaic.version = 11 : i64} {
  func.func @critic_kernel(%arg0: i32, %arg1: memref<8x128xbf16, #tpu.memory_space<vmem>>, %arg2: memref<128x512xbf16, #tpu.memory_space<vmem>>, %arg3: memref<1x512xf32, #tpu.memory_space<vmem>>, %arg4: memref<512x512xbf16, #tpu.memory_space<vmem>>, %arg5: memref<1x512xf32, #tpu.memory_space<vmem>>, %arg6: memref<512x128xbf16, #tpu.memory_space<vmem>>, %arg7: memref<1x128xf32, #tpu.memory_space<vmem>>, %arg8: memref<8x128xf32, #tpu.memory_space<vmem>>) attributes {dimension_semantics = [#tpu.dimension_semantics<parallel>], iteration_bounds = array<i64: 1>, scalar_prefetch = 0 : i64, scratch_operands = 0 : i64, tpu.core_type = #tpu.core_type<tc>, window_params = [{transform_indices = @transform_0, window_bounds = array<i64: 8, 128>}, {pipeline_mode = #tpu.pipeline_mode<synchronous>, transform_indices = @transform_1, window_bounds = array<i64: 128, 512>}, {pipeline_mode = #tpu.pipeline_mode<synchronous>, transform_indices = @transform_2, window_bounds = array<i64: 1, 512>}, {pipeline_mode = #tpu.pipeline_mode<synchronous>, transform_indices = @transform_3, window_bounds = array<i64: 512, 512>}, {pipeline_mode = #tpu.pipeline_mode<synchronous>, transform_indices = @transform_4, window_bounds = array<i64: 1, 512>}, {pipeline_mode = #tpu.pipeline_mode<synchronous>, transform_indices = @transform_5, window_bounds = array<i64: 512, 128>}, {pipeline_mode = #tpu.pipeline_mode<synchronous>, transform_indices = @transform_6, window_bounds = array<i64: 1, 128>}, {transform_indices = @transform_7, window_bounds = array<i64: 8, 128>}]} {
    %c0 = arith.constant 0 : index
    %c0_0 = arith.constant 0 : index
    %0 = vector.load %arg1[%c0, %c0_0] : memref<8x128xbf16, #tpu.memory_space<vmem>>, vector<8x128xbf16>
    %c0_1 = arith.constant 0 : index
    %c0_2 = arith.constant 0 : index
    %1 = vector.load %arg2[%c0_1, %c0_2] : memref<128x512xbf16, #tpu.memory_space<vmem>>, vector<128x512xbf16>
    %cst = arith.constant dense<0.000000e+00> : vector<8x512xf32>
    %2 = tpu.matmul %0, %1, %cst {dimension_numbers = #tpu.dot_dimension_numbers<[1], [0], [0], [1], [0, 0, 1, 1], [], []>} : vector<8x128xbf16>, vector<128x512xbf16>, vector<8x512xf32> -> vector<8x512xf32>
    %c0_3 = arith.constant 0 : index
    %c0_4 = arith.constant 0 : index
    %3 = vector.load %arg3[%c0_3, %c0_4] : memref<1x512xf32, #tpu.memory_space<vmem>>, vector<1x512xf32>
    %4 = vector.broadcast %3 : vector<1x512xf32> to vector<8x512xf32>
    %5 = arith.addf %2, %4 : vector<8x512xf32>
    %cst_5 = arith.constant 0.000000e+00 : f32
    %6 = vector.broadcast %cst_5 : f32 to vector<8x512xf32>
    %7 = arith.maximumf %5, %6 : vector<8x512xf32>
    %8 = arith.truncf %7 : vector<8x512xf32> to vector<8x512xbf16>
    %c0_6 = arith.constant 0 : index
    %c0_7 = arith.constant 0 : index
    %9 = vector.load %arg4[%c0_6, %c0_7] : memref<512x512xbf16, #tpu.memory_space<vmem>>, vector<512x512xbf16>
    %cst_8 = arith.constant dense<0.000000e+00> : vector<8x512xf32>
    %10 = tpu.matmul %8, %9, %cst_8 {dimension_numbers = #tpu.dot_dimension_numbers<[1], [0], [0], [1], [0, 0, 1, 1], [], []>} : vector<8x512xbf16>, vector<512x512xbf16>, vector<8x512xf32> -> vector<8x512xf32>
    %c0_9 = arith.constant 0 : index
    %c0_10 = arith.constant 0 : index
    %11 = vector.load %arg5[%c0_9, %c0_10] : memref<1x512xf32, #tpu.memory_space<vmem>>, vector<1x512xf32>
    %12 = vector.broadcast %11 : vector<1x512xf32> to vector<8x512xf32>
    %13 = arith.addf %10, %12 : vector<8x512xf32>
    %cst_11 = arith.constant 0.000000e+00 : f32
    %14 = vector.broadcast %cst_11 : f32 to vector<8x512xf32>
    %15 = arith.maximumf %13, %14 : vector<8x512xf32>
    %16 = arith.truncf %15 : vector<8x512xf32> to vector<8x512xbf16>
    %c0_12 = arith.constant 0 : index
    %c0_13 = arith.constant 0 : index
    %17 = vector.load %arg6[%c0_12, %c0_13] : memref<512x128xbf16, #tpu.memory_space<vmem>>, vector<512x128xbf16>
    %cst_14 = arith.constant dense<0.000000e+00> : vector<8x128xf32>
    %18 = tpu.matmul %16, %17, %cst_14 {dimension_numbers = #tpu.dot_dimension_numbers<[1], [0], [0], [1], [0, 0, 1, 1], [], []>} : vector<8x512xbf16>, vector<512x128xbf16>, vector<8x128xf32> -> vector<8x128xf32>
    %c0_15 = arith.constant 0 : index
    %c0_16 = arith.constant 0 : index
    %19 = vector.load %arg7[%c0_15, %c0_16] : memref<1x128xf32, #tpu.memory_space<vmem>>, vector<1x128xf32>
    %20 = vector.broadcast %19 : vector<1x128xf32> to vector<8x128xf32>
    %21 = arith.addf %18, %20 : vector<8x128xf32>
    %c0_17 = arith.constant 0 : index
    %c0_18 = arith.constant 0 : index
    %22 = vector.load %arg8[%c0_17, %c0_18] : memref<8x128xf32, #tpu.memory_space<vmem>>, vector<8x128xf32>
    tpu.vector_store %arg8[%c0_17, %c0_18], %21 {strides = array<i32>} : memref<8x128xf32, #tpu.memory_space<vmem>>, vector<8x128xf32>,
    return
  }
  func.func @transform_0(%arg0: i32) -> (i32, i32) {
    %c0_i32 = arith.constant 0 : i32
    %c0_i32_0 = arith.constant 0 : i32
    return %arg0, %c0_i32 : i32, i32
  }
  func.func @transform_1(%arg0: i32) -> (i32, i32) {
    %c0_i32 = arith.constant 0 : i32
    %c0_i32_0 = arith.constant 0 : i32
    %c0_i32_1 = arith.constant 0 : i32
    return %c0_i32, %c0_i32_0 : i32, i32
  }
  func.func @transform_2(%arg0: i32) -> (i32, i32) {
    %c0_i32 = arith.constant 0 : i32
    %c0_i32_0 = arith.constant 0 : i32
    %c0_i32_1 = arith.constant 0 : i32
    return %c0_i32, %c0_i32_0 : i32, i32
  }
  func.func @transform_3(%arg0: i32) -> (i32, i32) {
    %c0_i32 = arith.constant 0 : i32
    %c0_i32_0 = arith.constant 0 : i32
    %c0_i32_1 = arith.constant 0 : i32
    return %c0_i32, %c0_i32_0 : i32, i32
  }
  func.func @transform_4(%arg0: i32) -> (i32, i32) {
    %c0_i32 = arith.constant 0 : i32
    %c0_i32_0 = arith.constant 0 : i32
    %c0_i32_1 = arith.constant 0 : i32
    return %c0_i32, %c0_i32_0 : i32, i32
  }
  func.func @transform_5(%arg0: i32) -> (i32, i32) {
    %c0_i32 = arith.constant 0 : i32
    %c0_i32_0 = arith.constant 0 : i32
    %c0_i32_1 = arith.constant 0 : i32
    return %c0_i32, %c0_i32_0 : i32, i32
  }
  func.func @transform_6(%arg0: i32) -> (i32, i32) {
    %c0_i32 = arith.constant 0 : i32
    %c0_i32_0 = arith.constant 0 : i32
    %c0_i32_1 = arith.constant 0 : i32
    return %c0_i32, %c0_i32_0 : i32, i32
  }
  func.func @transform_7(%arg0: i32) -> (i32, i32) {
    %c0_i32 = arith.constant 0 : i32
    %c0_i32_0 = arith.constant 0 : i32
    return %arg0, %c0_i32 : i32, i32
  }
}

</mosaic_0001>

<llo_original>
// kernel: tpu_custom_call.1
$region0: #{tpu_custom_call.1}
  #allocation0 [shape = 'u32[]', space=smem, size = 0x4, offset = 0x4, fixed_abs, tag = 'smem constant byte address 0x4 - core index']
  #allocation1 [shape = 'u32[144,128]{1,0:T(1,128)}', space=vmem, size = 0x12000, scoped, tag = 'internal scratch']
  %s0 = inlined_call_operand.hbm [shape: bf16[8,128], index: 0, kind: input, shape index: {}]
  %s1 = inlined_call_operand.hbm [shape: bf16[128,512], index: 1, kind: input, shape index: {}]
  %s2 = inlined_call_operand.vmem [shape: f32[1,512], index: 2, kind: input, shape index: {}]
  %s3 = inlined_call_operand.hbm [shape: bf16[512,512], index: 3, kind: input, shape index: {}]
  %s4 = inlined_call_operand.vmem [shape: f32[1,512], index: 4, kind: input, shape index: {}]
  %s5 = inlined_call_operand.hbm [shape: bf16[512,128], index: 5, kind: input, shape index: {}]
  %s6 = inlined_call_operand.vmem [shape: f32[1,128], index: 6, kind: input, shape index: {}]
  %s7 = inlined_call_operand.hbm [shape: f32[8,128], index: 7, kind: output, shape index: {}]
  %s8 = sld [smem:[#allocation0]]
  $region54: #{tpu_custom_call.1} parent=0
    _
  %s10 = ssub.s32 1, %s8
  %s11 = scalar_select 0, %s10, %s8
  $region1: #{tpu_custom_call.1} parent=0
    #allocation2 [shape = 'u8[2048]{0}', space=vmem, size = 0x800, scoped, tag = 'input window, operand 0, single buffered']
    #allocation3 [shape = 's32[1]{0}', space=sflag, size = 0x4, scoped, tag = 'scoped memory for tpu_custom_call.1']
    #allocation4 [shape = 's32[1]{0}', space=sflag, size = 0x4, scoped, tag = 'scoped memory for tpu_custom_call.1']
    #allocation5 [shape = 'u8[131072]{0}', space=vmem, size = 0x20000, scoped, tag = 'input window, operand 1, single buffered']
    #allocation6 [shape = 's32[1]{0}', space=sflag, size = 0x4, scoped, tag = 'scoped memory for tpu_custom_call.1']
    #allocation7 [shape = 'u8[524288]{0}', space=vmem, size = 0x80000, scoped, tag = 'input window, operand 3, single buffered']
    #allocation8 [shape = 'u8[131072]{0}', space=vmem, size = 0x20000, scoped, tag = 'input window, operand 5, single buffered']
    #allocation9 [shape = 's32[1]{0}', space=sflag, size = 0x4, scoped, tag = 'scoped memory for tpu_custom_call.1']
    #allocation10 [shape = 'u8[4096]{0}', space=vmem, size = 0x1000, scoped, tag = 'output window, operand 0, single buffered']
    %12 = vsyncpa [#allocation3], 0
    %13 = vsyncpa [#allocation6], 0
    %14 = vsyncpa [#allocation9], 0
    %15 = vsyncpa [#allocation4], 0
    // Predicated region
    $region2: #{tpu_custom_call.1} parent=1 // pred_check
      _
    $region3: #{tpu_custom_call.1} parent=1 // pred_check_branch
      %17 = sbr.rel (0) target = $region5
    $region4: #{tpu_custom_call.1} parent=1 // pred_region
      %s19 = ssub.s32 64, 64
      %20 = vsyncadd [#allocation3], %s19
      %s22 = sshll.u32 [#allocation2], 4
      %s23 = int_to_ptr.vmem [resolvable:$true] %s22
      %25 = dma.hbm_to_vmem [thread:$0]  %s0, 64, %s23, [#allocation3]
    $region5: #{tpu_custom_call.1} parent=1 // pred_fallthru
      _
    // Predicated region
    $region6: #{tpu_custom_call.1} parent=1 // pred_check
      _
    $region7: #{tpu_custom_call.1} parent=1 // pred_check_branch
      %27 = sbr.rel (0) target = $region9
    $region8: #{tpu_custom_call.1} parent=1 // pred_region
      %s29 = ssub.s32 4096, 4096
      %30 = vsyncadd [#allocation6], %s29
      %s31 = sshll.u32 [#allocation5], 4
      %s32 = int_to_ptr.vmem [resolvable:$true] %s31
      %37 = dma.hbm_to_vmem [thread:$0]  %s1, 4096, %s32, [#allocation6], 256, 256, 16
    $region9: #{tpu_custom_call.1} parent=1 // pred_fallthru
      _
    // Predicated region
    $region10: #{tpu_custom_call.1} parent=1 // pred_check
      _
    $region11: #{tpu_custom_call.1} parent=1 // pred_check_branch
      %39 = sbr.rel (0) target = $region13
    $region12: #{tpu_custom_call.1} parent=1 // pred_region
      _
    $region13: #{tpu_custom_call.1} parent=1 // pred_fallthru
      _
    // Predicated region
    $region14: #{tpu_custom_call.1} parent=1 // pred_check
      _
    $region15: #{tpu_custom_call.1} parent=1 // pred_check_branch
      %41 = sbr.rel (0) target = $region17
    $region16: #{tpu_custom_call.1} parent=1 // pred_region
      %s43 = ssub.s32 16384, 16384
      %44 = vsyncadd [#allocation6], %s43
      %s45 = sshll.u32 [#allocation7], 4
      %s46 = int_to_ptr.vmem [resolvable:$true] %s45
      %51 = dma.hbm_to_vmem [thread:$0]  %s3, 16384, %s46, [#allocation6], 256, 256, 16
    $region17: #{tpu_custom_call.1} parent=1 // pred_fallthru
      _
    // Predicated region
    $region18: #{tpu_custom_call.1} parent=1 // pred_check
      _
    $region19: #{tpu_custom_call.1} parent=1 // pred_check_branch
      %53 = sbr.rel (0) target = $region21
    $region20: #{tpu_custom_call.1} parent=1 // pred_region
      _
    $region21: #{tpu_custom_call.1} parent=1 // pred_fallthru
      _
    // Predicated region
    $region22: #{tpu_custom_call.1} parent=1 // pred_check
      _
    $region23: #{tpu_custom_call.1} parent=1 // pred_check_branch
      %55 = sbr.rel (0) target = $region25
    $region24: #{tpu_custom_call.1} parent=1 // pred_region
      %s57 = ssub.s32 4096, 4096
      %58 = vsyncadd [#allocation9], %s57
      %s59 = sshll.u32 [#allocation8], 4
      %s60 = int_to_ptr.vmem [resolvable:$true] %s59
      %65 = dma.hbm_to_vmem [thread:$0]  %s5, 4096, %s60, [#allocation9], 64, 64, 4
    $region25: #{tpu_custom_call.1} parent=1 // pred_fallthru
      _
    // Predicated region
    $region26: #{tpu_custom_call.1} parent=1 // pred_check
      _
    $region27: #{tpu_custom_call.1} parent=1 // pred_check_branch
      %67 = sbr.rel (0) target = $region29
    $region28: #{tpu_custom_call.1} parent=1 // pred_region
      _
    $region29: #{tpu_custom_call.1} parent=1 // pred_fallthru
      _
    // Predicated region
    $region30: #{tpu_custom_call.1} parent=1 // pred_check
      _
    $region31: #{tpu_custom_call.1} parent=1 // pred_check_branch
      %69 = sbr.rel (0) target = $region33
    $region32: #{tpu_custom_call.1} parent=1 // pred_region
      %70 = dma.done [#allocation3], 64
    $region33: #{tpu_custom_call.1} parent=1 // pred_fallthru
      _
    // Predicated region
    $region34: #{tpu_custom_call.1} parent=1 // pred_check
      _
    $region35: #{tpu_custom_call.1} parent=1 // pred_check_branch
      %72 = sbr.rel (0) target = $region37
    $region36: #{tpu_custom_call.1} parent=1 // pred_region
      %73 = dma.done [#allocation6], 4096
    $region37: #{tpu_custom_call.1} parent=1 // pred_fallthru
      _
    // Predicated region
    $region38: #{tpu_custom_call.1} parent=1 // pred_check
      _
    $region39: #{tpu_custom_call.1} parent=1 // pred_check_branch
      %75 = sbr.rel (0) target = $region41
    $region40: #{tpu_custom_call.1} parent=1 // pred_region
      %76 = dma.done [#allocation6], 16384
    $region41: #{tpu_custom_call.1} parent=1 // pred_fallthru
      _
    // Predicated region
    $region42: #{tpu_custom_call.1} parent=1 // pred_check
      _
    $region43: #{tpu_custom_call.1} parent=1 // pred_check_branch
      %78 = sbr.rel (0) target = $region45
    $region44: #{tpu_custom_call.1} parent=1 // pred_region
      %79 = dma.done [#allocation9], 4096
    $region45: #{tpu_custom_call.1} parent=1 // pred_fallthru
      _
    %v81 = vld [vmem:[#allocation2] sm:$0xf]
    %v82 = vld [vmem:[#allocation5] sm:$0xff]
    %v83 = vld [vmem:[#allocation5 + $0x8] sm:$0xff]
    %v84 = vld [vmem:[#allocation5 + $0x10] sm:$0xff]
    %v85 = vld [vmem:[#allocation5 + $0x18] sm:$0xff]
    %v86 = vld [vmem:[#allocation5 + $0x20] sm:$0xff]
    %v87 = vld [vmem:[#allocation5 + $0x28] sm:$0xff]
    %v88 = vld [vmem:[#allocation5 + $0x30] sm:$0xff]
    %v89 = vld [vmem:[#allocation5 + $0x38] sm:$0xff]
    %v90 = vld [vmem:[#allocation5 + $0x40] sm:$0xff]
    %v91 = vld [vmem:[#allocation5 + $0x48] sm:$0xff]
    %v92 = vld [vmem:[#allocation5 + $0x50] sm:$0xff]
    %v93 = vld [vmem:[#allocation5 + $0x58] sm:$0xff]
    %v94 = vld [vmem:[#allocation5 + $0x60] sm:$0xff]
    %v95 = vld [vmem:[#allocation5 + $0x68] sm:$0xff]
    %v96 = vld [vmem:[#allocation5 + $0x70] sm:$0xff]
    %v97 = vld [vmem:[#allocation5 + $0x78] sm:$0xff]
    %v98 = vld [vmem:[#allocation5 + $0x80] sm:$0xff]
    %v99 = vld [vmem:[#allocation5 + $0x88] sm:$0xff]
    %v100 = vld [vmem:[#allocation5 + $0x90] sm:$0xff]
    %v101 = vld [vmem:[#allocation5 + $0x98] sm:$0xff]
    %v102 = vld [vmem:[#allocation5 + $0xa0] sm:$0xff]
    %v103 = vld [vmem:[#allocation5 + $0xa8] sm:$0xff]
    %v104 = vld [vmem:[#allocation5 + $0xb0] sm:$0xff]
    %v105 = vld [vmem:[#allocation5 + $0xb8] sm:$0xff]
    %v106 = vld [vmem:[#allocation5 + $0xc0] sm:$0xff]
    %v107 = vld [vmem:[#allocation5 + $0xc8] sm:$0xff]
    %v108 = vld [vmem:[#allocation5 + $0xd0] sm:$0xff]
    %v109 = vld [vmem:[#allocation5 + $0xd8] sm:$0xff]
    %v110 = vld [vmem:[#allocation5 + $0xe0] sm:$0xff]
    %v111 = vld [vmem:[#allocation5 + $0xe8] sm:$0xff]
    %v112 = vld [vmem:[#allocation5 + $0xf0] sm:$0xff]
    %v113 = vld [vmem:[#allocation5 + $0xf8] sm:$0xff]
    %v114 = vld [vmem:[%s2] sm:$0xf]
    %v116 = vlaneseq
    %v117 = vshrl.u32 %v116, 7
    %v118 = vsub.s32 0, %v117
    %v119 = vrot.slane %v114, %v118
    %v120 = vlaneseq
    %v121 = vshrl.u32 %v120, 7
    %v122 = vsub.s32 1, %v121
    %v123 = vrot.slane %v114, %v122
    %v124 = vlaneseq
    %v125 = vshrl.u32 %v124, 7
    %v126 = vsub.s32 2, %v125
    %v127 = vrot.slane %v114, %v126
    %v128 = vlaneseq
    %v129 = vshrl.u32 %v128, 7
    %v130 = vsub.s32 3, %v129
    %v131 = vrot.slane %v114, %v130
    %v168 = vunpack.c.l.b16 %v82
    %v169 = vunpack.c.h.b16 %v82
    %v170 = vunpack.c.l.b16 %v83
    %v171 = vunpack.c.h.b16 %v83
    %v172 = vunpack.c.l.b16 %v84
    %v173 = vunpack.c.h.b16 %v84
    %v174 = vunpack.c.l.b16 %v85
    %v175 = vunpack.c.h.b16 %v85
    %v176 = vunpack.c.l.b16 %v86
    %v177 = vunpack.c.h.b16 %v86
    %v178 = vunpack.c.l.b16 %v87
    %v179 = vunpack.c.h.b16 %v87
    %v180 = vunpack.c.l.b16 %v88
    %v181 = vunpack.c.h.b16 %v88
    %v182 = vunpack.c.l.b16 %v89
    %v183 = vunpack.c.h.b16 %v89
    %v184 = vunpack.c.l.b16 %v90
    %v185 = vunpack.c.h.b16 %v90
    %v186 = vunpack.c.l.b16 %v91
    %v187 = vunpack.c.h.b16 %v91
    %v188 = vunpack.c.l.b16 %v92
    %v189 = vunpack.c.h.b16 %v92
    %v190 = vunpack.c.l.b16 %v93
    %v191 = vunpack.c.h.b16 %v93
    %v192 = vunpack.c.l.b16 %v94
    %v193 = vunpack.c.h.b16 %v94
    %v194 = vunpack.c.l.b16 %v95
    %v195 = vunpack.c.h.b16 %v95
    %v196 = vunpack.c.l.b16 %v96
    %v197 = vunpack.c.h.b16 %v96
    %v198 = vunpack.c.l.b16 %v97
    %v199 = vunpack.c.h.b16 %v97
    %v200 = vunpack.c.l.b16 %v98
    %v201 = vunpack.c.h.b16 %v98
    %v202 = vunpack.c.l.b16 %v99
    %v203 = vunpack.c.h.b16 %v99
    %v204 = vunpack.c.l.b16 %v100
    %v205 = vunpack.c.h.b16 %v100
    %v206 = vunpack.c.l.b16 %v101
    %v207 = vunpack.c.h.b16 %v101
    %v208 = vunpack.c.l.b16 %v102
    %v209 = vunpack.c.h.b16 %v102
    %v210 = vunpack.c.l.b16 %v103
    %v211 = vunpack.c.h.b16 %v103
    %v212 = vunpack.c.l.b16 %v104
    %v213 = vunpack.c.h.b16 %v104
    %v214 = vunpack.c.l.b16 %v105
    %v215 = vunpack.c.h.b16 %v105
    %v216 = vunpack.c.l.b16 %v106
    %v217 = vunpack.c.h.b16 %v106
    %v218 = vunpack.c.l.b16 %v107
    %v219 = vunpack.c.h.b16 %v107
    %v220 = vunpack.c.l.b16 %v108
    %v221 = vunpack.c.h.b16 %v108
    %v222 = vunpack.c.l.b16 %v109
    %v223 = vunpack.c.h.b16 %v109
    %v224 = vunpack.c.l.b16 %v110
    %v225 = vunpack.c.h.b16 %v110
    %v226 = vunpack.c.l.b16 %v111
    %v227 = vunpack.c.h.b16 %v111
    %v228 = vunpack.c.l.b16 %v112
    %v229 = vunpack.c.h.b16 %v112
    %v230 = vunpack.c.l.b16 %v113
    %v231 = vunpack.c.h.b16 %v113
    %v232 = vpack.c.b16 %v172, %v168
    %v233 = vpack.c.b16 %v173, %v169
    %v234 = vpack.c.b16 %v174, %v170
    %v235 = vpack.c.b16 %v175, %v171
    %v236 = vpack.c.b16 %v180, %v176
    %v237 = vpack.c.b16 %v181, %v177
    %v238 = vpack.c.b16 %v182, %v178
    %v239 = vpack.c.b16 %v183, %v179
    %v240 = vpack.c.b16 %v188, %v184
    %v241 = vpack.c.b16 %v189, %v185
    %v242 = vpack.c.b16 %v190, %v186
    %v243 = vpack.c.b16 %v191, %v187
    %v244 = vpack.c.b16 %v196, %v192
    %v245 = vpack.c.b16 %v197, %v193
    %v246 = vpack.c.b16 %v198, %v194
    %v247 = vpack.c.b16 %v199, %v195
    %v248 = vpack.c.b16 %v204, %v200
    %v249 = vpack.c.b16 %v205, %v201
    %v250 = vpack.c.b16 %v206, %v202
    %v251 = vpack.c.b16 %v207, %v203
    %v252 = vpack.c.b16 %v212, %v208
    %v253 = vpack.c.b16 %v213, %v209
    %v254 = vpack.c.b16 %v214, %v210
    %v255 = vpack.c.b16 %v215, %v211
    %v256 = vpack.c.b16 %v220, %v216
    %v257 = vpack.c.b16 %v221, %v217
    %v258 = vpack.c.b16 %v222, %v218
    %v259 = vpack.c.b16 %v223, %v219
    %v260 = vpack.c.b16 %v228, %v224
    %v261 = vpack.c.b16 %v229, %v225
    %v262 = vpack.c.b16 %v230, %v226
    %v263 = vpack.c.b16 %v231, %v227
    %296 = vmatprep.subr.bf16.mxu0 %v233
    %297 = vmatpush1.bf16.msra.mxu0 %v232
    %298 = vmatprep.subr.bf16.mxu0 %v237
    %299 = vmatpush1.bf16.msra.mxu0 %v236
    %300 = vmatprep.subr.bf16.mxu0 %v241
    %301 = vmatpush1.bf16.msra.mxu0 %v240
    %302 = vmatprep.subr.bf16.mxu0 %v245
    %303 = vmatpush1.bf16.msra.mxu0 %v244
    %304 = vmatprep.subr.bf16.mxu0 %v249
    %305 = vmatpush1.bf16.msra.mxu0 %v248
    %306 = vmatprep.subr.bf16.mxu0 %v253
    %307 = vmatpush1.bf16.msra.mxu0 %v252
    %308 = vmatprep.subr.bf16.mxu0 %v257
    %309 = vmatpush1.bf16.msra.mxu0 %v256
    %310 = vmatprep.subr.bf16.mxu0 %v261
    %311 = vmatpush1.bf16.msra.mxu0 %v260
    %312 = vmatprep.subr.bf16.mxu0 0
    %313 = vmatpush1.bf16.msra.mxu0 0
    %314 = vmatprep.subr.bf16.mxu0 0
    %315 = vmatpush1.bf16.msra.mxu0 0
    %316 = vmatprep.subr.bf16.mxu0 0
    %317 = vmatpush1.bf16.msra.mxu0 0
    %318 = vmatprep.subr.bf16.mxu0 0
    %319 = vmatpush1.bf16.msra.mxu0 0
    %320 = vmatprep.subr.bf16.mxu0 0
    %321 = vmatpush1.bf16.msra.mxu0 0
    %322 = vmatprep.subr.bf16.mxu0 0
    %323 = vmatpush1.bf16.msra.mxu0 0
    %324 = vmatprep.subr.bf16.mxu0 0
    %325 = vmatpush1.bf16.msra.mxu0 0
    %326 = vmatprep.subr.bf16.mxu0 0
    %327 = vmatpush1.bf16.msra.mxu0 0
    %328 = vmatprep.mubr.bf16.mxu0 0
    %329 = vmatmul.mubr.bf16.gmra.mrb[0].mxu0 %v81
    %v330 = vpop.f32.mrb[0].mxu0
    %v331 = vadd.f32 %v119, %v330
    %v332 = vpop.f32.mrb[0].mxu0
    %v333 = vadd.f32 %v123, %v332
    %v334 = vpop.f32.mrb[0].mxu0
    %v335 = vpop.f32.mrb[0].mxu0
    %336 = vdwg.mxu0
    %337 = vmatprep.subr.bf16.mxu0 %v235
    %338 = vmatpush1.bf16.msra.mxu0 %v234
    %339 = vmatprep.subr.bf16.mxu0 %v239
    %340 = vmatpush1.bf16.msra.mxu0 %v238
    %341 = vmatprep.subr.bf16.mxu0 %v243
    %342 = vmatpush1.bf16.msra.mxu0 %v242
    %343 = vmatprep.subr.bf16.mxu0 %v247
    %344 = vmatpush1.bf16.msra.mxu0 %v246
    %345 = vmatprep.subr.bf16.mxu0 %v251
    %346 = vmatpush1.bf16.msra.mxu0 %v250
    %347 = vmatprep.subr.bf16.mxu0 %v255
    %348 = vmatpush1.bf16.msra.mxu0 %v254
    %349 = vmatprep.subr.bf16.mxu0 %v259
    %350 = vmatpush1.bf16.msra.mxu0 %v258
    %351 = vmatprep.subr.bf16.mxu0 %v263
    %352 = vmatpush1.bf16.msra.mxu0 %v262
    %353 = vmatprep.subr.bf16.mxu0 0
    %354 = vmatpush1.bf16.msra.mxu0 0
    %355 = vmatprep.subr.bf16.mxu0 0
    %356 = vmatpush1.bf16.msra.mxu0 0
    %357 = vmatprep.subr.bf16.mxu0 0
    %358 = vmatpush1.bf16.msra.mxu0 0
    %359 = vmatprep.subr.bf16.mxu0 0
    %360 = vmatpush1.bf16.msra.mxu0 0
    %361 = vmatprep.subr.bf16.mxu0 0
    %362 = vmatpush1.bf16.msra.mxu0 0
    %363 = vmatprep.subr.bf16.mxu0 0
    %364 = vmatpush1.bf16.msra.mxu0 0
    %365 = vmatprep.subr.bf16.mxu0 0
    %366 = vmatpush1.bf16.msra.mxu0 0
    %367 = vmatprep.subr.bf16.mxu0 0
    %368 = vmatpush1.bf16.msra.mxu0 0
    %369 = vmatprep.mubr.bf16.mxu0 0
    %370 = vmatmul.mubr.bf16.gmra.mrb[0].mxu0 %v81
    %v371 = vpop.f32.mrb[0].mxu0
    %v372 = vadd.f32 %v127, %v371
    %v373 = vpop.f32.mrb[0].mxu0
    %v374 = vadd.f32 %v131, %v373
    %v375 = vpop.f32.mrb[0].mxu0
    %v376 = vpop.f32.mrb[0].mxu0
    %377 = vdwg.mxu0
    %v378 = vmax.f32 %v331, 0.0
    %v379 = vmax.f32 %v333, 0.0
    %v380 = vmax.f32 %v372, 0.0
    %v381 = vmax.f32 %v374, 0.0
    %v382 = vpack.c.bf16 %v378, %v378
    %v383 = vpack.c.bf16 %v379, %v379
    %v384 = vpack.c.bf16 %v380, %v380
    %v385 = vpack.c.bf16 %v381, %v381
    %v386 = vld [vmem:[#allocation7] sm:$0xff]
    %v387 = vld [vmem:[#allocation7 + $0x8] sm:$0xff]
    %v388 = vld [vmem:[#allocation7 + $0x10] sm:$0xff]
    %v389 = vld [vmem:[#allocation7 + $0x18] sm:$0xff]
    %v390 = vld [vmem:[#allocation7 + $0x20] sm:$0xff]
    %v391 = vld [vmem:[#allocation7 + $0x28] sm:$0xff]
    %v392 = vld [vmem:[#allocation7 + $0x30] sm:$0xff]
    %v393 = vld [vmem:[#allocation7 + $0x38] sm:$0xff]
    %v394 = vld [vmem:[#allocation7 + $0x40] sm:$0xff]
    %v395 = vld [vmem:[#allocation7 + $0x48] sm:$0xff]
    %v396 = vld [vmem:[#allocation7 + $0x50] sm:$0xff]
    %v397 = vld [vmem:[#allocation7 + $0x58] sm:$0xff]
    %v398 = vld [vmem:[#allocation7 + $0x60] sm:$0xff]
    %v399 = vld [vmem:[#allocation7 + $0x68] sm:$0xff]
    %v400 = vld [vmem:[#allocation7 + $0x70] sm:$0xff]
    %v401 = vld [vmem:[#allocation7 + $0x78] sm:$0xff]
    %v402 = vld [vmem:[#allocation7 + $0x80] sm:$0xff]
    %v403 = vld [vmem:[#allocation7 + $0x88] sm:$0xff]
    %v404 = vld [vmem:[#allocation7 + $0x90] sm:$0xff]
    %v405 = vld [vmem:[#allocation7 + $0x98] sm:$0xff]
    %v406 = vld [vmem:[#allocation7 + $0xa0] sm:$0xff]
    %v407 = vld [vmem:[#allocation7 + $0xa8] sm:$0xff]
    %v408 = vld [vmem:[#allocation7 + $0xb0] sm:$0xff]
    %v409 = vld [vmem:[#allocation7 + $0xb8] sm:$0xff]
    %v410 = vld [vmem:[#allocation7 + $0xc0] sm:$0xff]
    %v411 = vld [vmem:[#allocation7 + $0xc8] sm:$0xff]
    %v412 = vld [vmem:[#allocation7 + $0xd0] sm:$0xff]
    %v413 = vld [vmem:[#allocation7 + $0xd8] sm:$0xff]
    %v414 = vld [vmem:[#allocation7 + $0xe0] sm:$0xff]
    %v415 = vld [vmem:[#allocation7 + $0xe8] sm:$0xff]
    %v416 = vld [vmem:[#allocation7 + $0xf0] sm:$0xff]
    %v417 = vld [vmem:[#allocation7 + $0xf8] sm:$0xff]
    %v418 = vld [vmem:[#allocation7 + $0x100] sm:$0xff]
    %v419 = vld [vmem:[#allocation7 + $0x108] sm:$0xff]
    %v420 = vld [vmem:[#allocation7 + $0x110] sm:$0xff]
    %v421 = vld [vmem:[#allocation7 + $0x118] sm:$0xff]
    %v422 = vld [vmem:[#allocation7 + $0x120] sm:$0xff]
    %v423 = vld [vmem:[#allocation7 + $0x128] sm:$0xff]
    %v424 = vld [vmem:[#allocation7 + $0x130] sm:$0xff]
    %v425 = vld [vmem:[#allocation7 + $0x138] sm:$0xff]
    %v426 = vld [vmem:[#allocation7 + $0x140] sm:$0xff]
    %v427 = vld [vmem:[#allocation7 + $0x148] sm:$0xff]
    %v428 = vld [vmem:[#allocation7 + $0x150] sm:$0xff]
    %v429 = vld [vmem:[#allocation7 + $0x158] sm:$0xff]
    %v430 = vld [vmem:[#allocation7 + $0x160] sm:$0xff]
    %v431 = vld [vmem:[#allocation7 + $0x168] sm:$0xff]
    %v432 = vld [vmem:[#allocation7 + $0x170] sm:$0xff]
    %v433 = vld [vmem:[#allocation7 + $0x178] sm:$0xff]
    %v434 = vld [vmem:[#allocation7 + $0x180] sm:$0xff]
    %v435 = vld [vmem:[#allocation7 + $0x188] sm:$0xff]
    %v436 = vld [vmem:[#allocation7 + $0x190] sm:$0xff]
    %v437 = vld [vmem:[#allocation7 + $0x198] sm:$0xff]
    %v438 = vld [vmem:[#allocation7 + $0x1a0] sm:$0xff]
    %v439 = vld [vmem:[#allocation7 + $0x1a8] sm:$0xff]
    %v440 = vld [vmem:[#allocation7 + $0x1b0] sm:$0xff]
    %v441 = vld [vmem:[#allocation7 + $0x1b8] sm:$0xff]
    %v442 = vld [vmem:[#allocation7 + $0x1c0] sm:$0xff]
    %v443 = vld [vmem:[#allocation7 + $0x1c8] sm:$0xff]
    %v444 = vld [vmem:[#allocation7 + $0x1d0] sm:$0xff]
    %v445 = vld [vmem:[#allocation7 + $0x1d8] sm:$0xff]
    %v446 = vld [vmem:[#allocation7 + $0x1e0] sm:$0xff]
    %v447 = vld [vmem:[#allocation7 + $0x1e8] sm:$0xff]
    %v448 = vld [vmem:[#allocation7 + $0x1f0] sm:$0xff]
    %v449 = vld [vmem:[#allocation7 + $0x1f8] sm:$0xff]
    %v450 = vld [vmem:[#allocation7 + $0x200] sm:$0xff]
    %v451 = vld [vmem:[#allocation7 + $0x208] sm:$0xff]
    %v452 = vld [vmem:[#allocation7 + $0x210] sm:$0xff]
    %v453 = vld [vmem:[#allocation7 + $0x218] sm:$0xff]
    %v454 = vld [vmem:[#allocation7 + $0x220] sm:$0xff]
    %v455 = vld [vmem:[#allocation7 + $0x228] sm:$0xff]
    %v456 = vld [vmem:[#allocation7 + $0x230] sm:$0xff]
    %v457 = vld [vmem:[#allocation7 + $0x238] sm:$0xff]
    %v458 = vld [vmem:[#allocation7 + $0x240] sm:$0xff]
    %v459 = vld [vmem:[#allocation7 + $0x248] sm:$0xff]
    %v460 = vld [vmem:[#allocation7 + $0x250] sm:$0xff]
    %v461 = vld [vmem:[#allocation7 + $0x258] sm:$0xff]
    %v462 = vld [vmem:[#allocation7 + $0x260] sm:$0xff]
    %v463 = vld [vmem:[#allocation7 + $0x268] sm:$0xff]
    %v464 = vld [vmem:[#allocation7 + $0x270] sm:$0xff]
    %v465 = vld [vmem:[#allocation7 + $0x278] sm:$0xff]
    %v466 = vld [vmem:[#allocation7 + $0x280] sm:$0xff]
    %v467 = vld [vmem:[#allocation7 + $0x288] sm:$0xff]
    %v468 = vld [vmem:[#allocation7 + $0x290] sm:$0xff]
    %v469 = vld [vmem:[#allocation7 + $0x298] sm:$0xff]
    %v470 = vld [vmem:[#allocation7 + $0x2a0] sm:$0xff]
    %v471 = vld [vmem:[#allocation7 + $0x2a8] sm:$0xff]
    %v472 = vld [vmem:[#allocation7 + $0x2b0] sm:$0xff]
    %v473 = vld [vmem:[#allocation7 + $0x2b8] sm:$0xff]
    %v474 = vld [vmem:[#allocation7 + $0x2c0] sm:$0xff]
    %v475 = vld [vmem:[#allocation7 + $0x2c8] sm:$0xff]
    %v476 = vld [vmem:[#allocation7 + $0x2d0] sm:$0xff]
    %v477 = vld [vmem:[#allocation7 + $0x2d8] sm:$0xff]
    %v478 = vld [vmem:[#allocation7 + $0x2e0] sm:$0xff]
    %v479 = vld [vmem:[#allocation7 + $0x2e8] sm:$0xff]
    %v480 = vld [vmem:[#allocation7 + $0x2f0] sm:$0xff]
    %v481 = vld [vmem:[#allocation7 + $0x2f8] sm:$0xff]
    %v482 = vld [vmem:[#allocation7 + $0x300] sm:$0xff]
    %v483 = vld [vmem:[#allocation7 + $0x308] sm:$0xff]
    %v484 = vld [vmem:[#allocation7 + $0x310] sm:$0xff]
    %v485 = vld [vmem:[#allocation7 + $0x318] sm:$0xff]
    %v486 = vld [vmem:[#allocation7 + $0x320] sm:$0xff]
    %v487 = vld [vmem:[#allocation7 + $0x328] sm:$0xff]
    %v488 = vld [vmem:[#allocation7 + $0x330] sm:$0xff]
    %v489 = vld [vmem:[#allocation7 + $0x338] sm:$0xff]
    %v490 = vld [vmem:[#allocation7 + $0x340] sm:$0xff]
    %v491 = vld [vmem:[#allocation7 + $0x348] sm:$0xff]
    %v492 = vld [vmem:[#allocation7 + $0x350] sm:$0xff]
    %v493 = vld [vmem:[#allocation7 + $0x358] sm:$0xff]
    %v494 = vld [vmem:[#allocation7 + $0x360] sm:$0xff]
    %v495 = vld [vmem:[#allocation7 + $0x368] sm:$0xff]
    %v496 = vld [vmem:[#allocation7 + $0x370] sm:$0xff]
    %v497 = vld [vmem:[#allocation7 + $0x378] sm:$0xff]
    %v498 = vld [vmem:[#allocation7 + $0x380] sm:$0xff]
    %v499 = vld [vmem:[#allocation7 + $0x388] sm:$0xff]
    %v500 = vld [vmem:[#allocation7 + $0x390] sm:$0xff]
    %v501 = vld [vmem:[#allocation7 + $0x398] sm:$0xff]
    %v502 = vld [vmem:[#allocation7 + $0x3a0] sm:$0xff]
    %v503 = vld [vmem:[#allocation7 + $0x3a8] sm:$0xff]
    %v504 = vld [vmem:[#allocation7 + $0x3b0] sm:$0xff]
    %v505 = vld [vmem:[#allocation7 + $0x3b8] sm:$0xff]
    %v506 = vld [vmem:[#allocation7 + $0x3c0] sm:$0xff]
    %v507 = vld [vmem:[#allocation7 + $0x3c8] sm:$0xff]
    %v508 = vld [vmem:[#allocation7 + $0x3d0] sm:$0xff]
    %v509 = vld [vmem:[#allocation7 + $0x3d8] sm:$0xff]
    %v510 = vld [vmem:[#allocation7 + $0x3e0] sm:$0xff]
    %v511 = vld [vmem:[#allocation7 + $0x3e8] sm:$0xff]
    %v512 = vld [vmem:[#allocation7 + $0x3f0] sm:$0xff]
    %v513 = vld [vmem:[#allocation7 + $0x3f8] sm:$0xff]
    %v514 = vld [vmem:[%s4] sm:$0xf]
    %v516 = vlaneseq
    %v517 = vshrl.u32 %v516, 7
    %v518 = vsub.s32 0, %v517
    %v519 = vrot.slane %v514, %v518
    %v520 = vlaneseq
    %v521 = vshrl.u32 %v520, 7
    %v522 = vsub.s32 1, %v521
    %v523 = vrot.slane %v514, %v522
    %v524 = vlaneseq
    %v525 = vshrl.u32 %v524, 7
    %v526 = vsub.s32 2, %v525
    %v527 = vrot.slane %v514, %v526
    %v528 = vlaneseq
    %v529 = vshrl.u32 %v528, 7
    %v530 = vsub.s32 3, %v529
    %v531 = vrot.slane %v514, %v530
    %v664 = vunpack.c.l.b16 %v386
    %v665 = vunpack.c.h.b16 %v386
    %v666 = vunpack.c.l.b16 %v387
    %v667 = vunpack.c.h.b16 %v387
    %v668 = vunpack.c.l.b16 %v388
    %v669 = vunpack.c.h.b16 %v388
    %v670 = vunpack.c.l.b16 %v389
    %v671 = vunpack.c.h.b16 %v389
    %v672 = vunpack.c.l.b16 %v390
    %v673 = vunpack.c.h.b16 %v390
    %v674 = vunpack.c.l.b16 %v391
    %v675 = vunpack.c.h.b16 %v391
    %v676 = vunpack.c.l.b16 %v392
    %v677 = vunpack.c.h.b16 %v392
    %v678 = vunpack.c.l.b16 %v393
    %v679 = vunpack.c.h.b16 %v393
    %v680 = vunpack.c.l.b16 %v394
    %v681 = vunpack.c.h.b16 %v394
    %v682 = vunpack.c.l.b16 %v395
    %v683 = vunpack.c.h.b16 %v395
    %v684 = vunpack.c.l.b16 %v396
    %v685 = vunpack.c.h.b16 %v396
    %v686 = vunpack.c.l.b16 %v397
    %v687 = vunpack.c.h.b16 %v397
    %v688 = vunpack.c.l.b16 %v398
    %v689 = vunpack.c.h.b16 %v398
    %v690 = vunpack.c.l.b16 %v399
    %v691 = vunpack.c.h.b16 %v399
    %v692 = vunpack.c.l.b16 %v400
    %v693 = vunpack.c.h.b16 %v400
    %v694 = vunpack.c.l.b16 %v401
    %v695 = vunpack.c.h.b16 %v401
    %v696 = vunpack.c.l.b16 %v402
    %v697 = vunpack.c.h.b16 %v402
    %v698 = vunpack.c.l.b16 %v403
    %v699 = vunpack.c.h.b16 %v403
    %v700 = vunpack.c.l.b16 %v404
    %v701 = vunpack.c.h.b16 %v404
    %v702 = vunpack.c.l.b16 %v405
    %v703 = vunpack.c.h.b16 %v405
    %v704 = vunpack.c.l.b16 %v406
    %v705 = vunpack.c.h.b16 %v406
    %v706 = vunpack.c.l.b16 %v407
    %v707 = vunpack.c.h.b16 %v407
    %v708 = vunpack.c.l.b16 %v408
    %v709 = vunpack.c.h.b16 %v408
    %v710 = vunpack.c.l.b16 %v409
    %v711 = vunpack.c.h.b16 %v409
    %v712 = vunpack.c.l.b16 %v410
    %v713 = vunpack.c.h.b16 %v410
    %v714 = vunpack.c.l.b16 %v411
    %v715 = vunpack.c.h.b16 %v411
    %v716 = vunpack.c.l.b16 %v412
    %v717 = vunpack.c.h.b16 %v412
    %v718 = vunpack.c.l.b16 %v413
    %v719 = vunpack.c.h.b16 %v413
    %v720 = vunpack.c.l.b16 %v414
    %v721 = vunpack.c.h.b16 %v414
    %v722 = vunpack.c.l.b16 %v415
    %v723 = vunpack.c.h.b16 %v415
    %v724 = vunpack.c.l.b16 %v416
    %v725 = vunpack.c.h.b16 %v416
    %v726 = vunpack.c.l.b16 %v417
    %v727 = vunpack.c.h.b16 %v417
    %v728 = vunpack.c.l.b16 %v418
    %v729 = vunpack.c.h.b16 %v418
    %v730 = vunpack.c.l.b16 %v419
    %v731 = vunpack.c.h.b16 %v419
    %v732 = vunpack.c.l.b16 %v420
    %v733 = vunpack.c.h.b16 %v420
    %v734 = vunpack.c.l.b16 %v421
    %v735 = vunpack.c.h.b16 %v421
    %v736 = vunpack.c.l.b16 %v422
    %v737 = vunpack.c.h.b16 %v422
    %v738 = vunpack.c.l.b16 %v423
    %v739 = vunpack.c.h.b16 %v423
    %v740 = vunpack.c.l.b16 %v424
    %v741 = vunpack.c.h.b16 %v424
    %v742 = vunpack.c.l.b16 %v425
    %v743 = vunpack.c.h.b16 %v425
    %v744 = vunpack.c.l.b16 %v426
    %v745 = vunpack.c.h.b16 %v426
    %v746 = vunpack.c.l.b16 %v427
    %v747 = vunpack.c.h.b16 %v427
    %v748 = vunpack.c.l.b16 %v428
    %v749 = vunpack.c.h.b16 %v428
    %v750 = vunpack.c.l.b16 %v429
    %v751 = vunpack.c.h.b16 %v429
    %v752 = vunpack.c.l.b16 %v430
    %v753 = vunpack.c.h.b16 %v430
    %v754 = vunpack.c.l.b16 %v431
    %v755 = vunpack.c.h.b16 %v431
    %v756 = vunpack.c.l.b16 %v432
    %v757 = vunpack.c.h.b16 %v432
    %v758 = vunpack.c.l.b16 %v433
    %v759 = vunpack.c.h.b16 %v433
    %v760 = vunpack.c.l.b16 %v434
    %v761 = vunpack.c.h.b16 %v434
    %v762 = vunpack.c.l.b16 %v435
    %v763 = vunpack.c.h.b16 %v435
    %v764 = vunpack.c.l.b16 %v436
    %v765 = vunpack.c.h.b16 %v436
    %v766 = vunpack.c.l.b16 %v437
    %v767 = vunpack.c.h.b16 %v437
    %v768 = vunpack.c.l.b16 %v438
    %v769 = vunpack.c.h.b16 %v438
    %v770 = vunpack.c.l.b16 %v439
    %v771 = vunpack.c.h.b16 %v439
    %v772 = vunpack.c.l.b16 %v440
    %v773 = vunpack.c.h.b16 %v440
    %v774 = vunpack.c.l.b16 %v441
    %v775 = vunpack.c.h.b16 %v441
    %v776 = vunpack.c.l.b16 %v442
    %v777 = vunpack.c.h.b16 %v442
    %v778 = vunpack.c.l.b16 %v443
    %v779 = vunpack.c.h.b16 %v443
    %v780 = vunpack.c.l.b16 %v444
    %v781 = vunpack.c.h.b16 %v444
    %v782 = vunpack.c.l.b16 %v445
    %v783 = vunpack.c.h.b16 %v445
    %v784 = vunpack.c.l.b16 %v446
    %v785 = vunpack.c.h.b16 %v446
    %v786 = vunpack.c.l.b16 %v447
    %v787 = vunpack.c.h.b16 %v447
    %v788 = vunpack.c.l.b16 %v448
    %v789 = vunpack.c.h.b16 %v448
    %v790 = vunpack.c.l.b16 %v449
    %v791 = vunpack.c.h.b16 %v449
    %v792 = vunpack.c.l.b16 %v450
    %v793 = vunpack.c.h.b16 %v450
    %v794 = vunpack.c.l.b16 %v451
    %v795 = vunpack.c.h.b16 %v451
    %v796 = vunpack.c.l.b16 %v452
    %v797 = vunpack.c.h.b16 %v452
    %v798 = vunpack.c.l.b16 %v453
    %v799 = vunpack.c.h.b16 %v453
    %v800 = vunpack.c.l.b16 %v454
    %v801 = vunpack.c.h.b16 %v454
    %v802 = vunpack.c.l.b16 %v455
    %v803 = vunpack.c.h.b16 %v455
    %v804 = vunpack.c.l.b16 %v456
    %v805 = vunpack.c.h.b16 %v456
    %v806 = vunpack.c.l.b16 %v457
    %v807 = vunpack.c.h.b16 %v457
    %v808 = vunpack.c.l.b16 %v458
    %v809 = vunpack.c.h.b16 %v458
    %v810 = vunpack.c.l.b16 %v459
    %v811 = vunpack.c.h.b16 %v459
    %v812 = vunpack.c.l.b16 %v460
    %v813 = vunpack.c.h.b16 %v460
    %v814 = vunpack.c.l.b16 %v461
    %v815 = vunpack.c.h.b16 %v461
    %v816 = vunpack.c.l.b16 %v462
    %v817 = vunpack.c.h.b16 %v462
    %v818 = vunpack.c.l.b16 %v463
    %v819 = vunpack.c.h.b16 %v463
    %v820 = vunpack.c.l.b16 %v464
    %v821 = vunpack.c.h.b16 %v464
    %v822 = vunpack.c.l.b16 %v465
    %v823 = vunpack.c.h.b16 %v465
    %v824 = vunpack.c.l.b16 %v466
    %v825 = vunpack.c.h.b16 %v466
    %v826 = vunpack.c.l.b16 %v467
    %v827 = vunpack.c.h.b16 %v467
    %v828 = vunpack.c.l.b16 %v468
    %v829 = vunpack.c.h.b16 %v468
    %v830 = vunpack.c.l.b16 %v469
    %v831 = vunpack.c.h.b16 %v469
    %v832 = vunpack.c.l.b16 %v470
    %v833 = vunpack.c.h.b16 %v470
    %v834 = vunpack.c.l.b16 %v471
    %v835 = vunpack.c.h.b16 %v471
    %v836 = vunpack.c.l.b16 %v472
    %v837 = vunpack.c.h.b16 %v472
    %v838 = vunpack.c.l.b16 %v473
    %v839 = vunpack.c.h.b16 %v473
    %v840 = vunpack.c.l.b16 %v474
    %v841 = vunpack.c.h.b16 %v474
    %v842 = vunpack.c.l.b16 %v475
    %v843 = vunpack.c.h.b16 %v475
    %v844 = vunpack.c.l.b16 %v476
    %v845 = vunpack.c.h.b16 %v476
    %v846 = vunpack.c.l.b16 %v477
    %v847 = vunpack.c.h.b16 %v477
    %v848 = vunpack.c.l.b16 %v478
    %v849 = vunpack.c.h.b16 %v478
    %v850 = vunpack.c.l.b16 %v479
    %v851 = vunpack.c.h.b16 %v479
    %v852 = vunpack.c.l.b16 %v480
    %v853 = vunpack.c.h.b16 %v480
    %v854 = vunpack.c.l.b16 %v481
    %v855 = vunpack.c.h.b16 %v481
    %v856 = vunpack.c.l.b16 %v482
    %v857 = vunpack.c.h.b16 %v482
    %v858 = vunpack.c.l.b16 %v483
    %v859 = vunpack.c.h.b16 %v483
    %v860 = vunpack.c.l.b16 %v484
    %v861 = vunpack.c.h.b16 %v484
    %v862 = vunpack.c.l.b16 %v485
    %v863 = vunpack.c.h.b16 %v485
    %v864 = vunpack.c.l.b16 %v486
    %v865 = vunpack.c.h.b16 %v486
    %v866 = vunpack.c.l.b16 %v487
    %v867 = vunpack.c.h.b16 %v487
    %v868 = vunpack.c.l.b16 %v488
    %v869 = vunpack.c.h.b16 %v488
    %v870 = vunpack.c.l.b16 %v489
    %v871 = vunpack.c.h.b16 %v489
    %v872 = vunpack.c.l.b16 %v490
    %v873 = vunpack.c.h.b16 %v490
    %v874 = vunpack.c.l.b16 %v491
    %v875 = vunpack.c.h.b16 %v491
    %v876 = vunpack.c.l.b16 %v492
    %v877 = vunpack.c.h.b16 %v492
    %v878 = vunpack.c.l.b16 %v493
    %v879 = vunpack.c.h.b16 %v493
    %v880 = vunpack.c.l.b16 %v494
    %v881 = vunpack.c.h.b16 %v494
    %v882 = vunpack.c.l.b16 %v495
    %v883 = vunpack.c.h.b16 %v495
    %v884 = vunpack.c.l.b16 %v496
    %v885 = vunpack.c.h.b16 %v496
    %v886 = vunpack.c.l.b16 %v497
    %v887 = vunpack.c.h.b16 %v497
    %v888 = vunpack.c.l.b16 %v498
    %v889 = vunpack.c.h.b16 %v498
    %v890 = vunpack.c.l.b16 %v499
    %v891 = vunpack.c.h.b16 %v499
    %v892 = vunpack.c.l.b16 %v500
    %v893 = vunpack.c.h.b16 %v500
    %v894 = vunpack.c.l.b16 %v501
    %v895 = vunpack.c.h.b16 %v501
    %v896 = vunpack.c.l.b16 %v502
    %v897 = vunpack.c.h.b16 %v502
    %v898 = vunpack.c.l.b16 %v503
    %v899 = vunpack.c.h.b16 %v503
    %v900 = vunpack.c.l.b16 %v504
    %v901 = vunpack.c.h.b16 %v504
    %v902 = vunpack.c.l.b16 %v505
    %v903 = vunpack.c.h.b16 %v505
    %v904 = vunpack.c.l.b16 %v506
    %v905 = vunpack.c.h.b16 %v506
    %v906 = vunpack.c.l.b16 %v507
    %v907 = vunpack.c.h.b16 %v507
    %v908 = vunpack.c.l.b16 %v508
    %v909 = vunpack.c.h.b16 %v508
    %v910 = vunpack.c.l.b16 %v509
    %v911 = vunpack.c.h.b16 %v509
    %v912 = vunpack.c.l.b16 %v510
    %v913 = vunpack.c.h.b16 %v510
    %v914 = vunpack.c.l.b16 %v511
    %v915 = vunpack.c.h.b16 %v511
    %v916 = vunpack.c.l.b16 %v512
    %v917 = vunpack.c.h.b16 %v512
    %v918 = vunpack.c.l.b16 %v513
    %v919 = vunpack.c.h.b16 %v513
    %v920 = vpack.c.b16 %v668, %v664
    %v921 = vpack.c.b16 %v669, %v665
    %v922 = vpack.c.b16 %v670, %v666
    %v923 = vpack.c.b16 %v671, %v667
    %v924 = vpack.c.b16 %v676, %v672
    %v925 = vpack.c.b16 %v677, %v673
    %v926 = vpack.c.b16 %v678, %v674
    %v927 = vpack.c.b16 %v679, %v675
    %v928 = vpack.c.b16 %v684, %v680
    %v929 = vpack.c.b16 %v685, %v681
    %v930 = vpack.c.b16 %v686, %v682
    %v931 = vpack.c.b16 %v687, %v683
    %v932 = vpack.c.b16 %v692, %v688
    %v933 = vpack.c.b16 %v693, %v689
    %v934 = vpack.c.b16 %v694, %v690
    %v935 = vpack.c.b16 %v695, %v691
    %v936 = vpack.c.b16 %v700, %v696
    %v937 = vpack.c.b16 %v701, %v697
    %v938 = vpack.c.b16 %v702, %v698
    %v939 = vpack.c.b16 %v703, %v699
    %v940 = vpack.c.b16 %v708, %v704
    %v941 = vpack.c.b16 %v709, %v705
    %v942 = vpack.c.b16 %v710, %v706
    %v943 = vpack.c.b16 %v711, %v707
    %v944 = vpack.c.b16 %v716, %v712
    %v945 = vpack.c.b16 %v717, %v713
    %v946 = vpack.c.b16 %v718, %v714
    %v947 = vpack.c.b16 %v719, %v715
    %v948 = vpack.c.b16 %v724, %v720
    %v949 = vpack.c.b16 %v725, %v721
    %v950 = vpack.c.b16 %v726, %v722
    %v951 = vpack.c.b16 %v727, %v723
    %v952 = vpack.c.b16 %v732, %v728
    %v953 = vpack.c.b16 %v733, %v729
    %v954 = vpack.c.b16 %v734, %v730
    %v955 = vpack.c.b16 %v735, %v731
    %v956 = vpack.c.b16 %v740, %v736
    %v957 = vpack.c.b16 %v741, %v737
    %v958 = vpack.c.b16 %v742, %v738
    %v959 = vpack.c.b16 %v743, %v739
    %v960 = vpack.c.b16 %v748, %v744
    %v961 = vpack.c.b16 %v749, %v745
    %v962 = vpack.c.b16 %v750, %v746
    %v963 = vpack.c.b16 %v751, %v747
    %v964 = vpack.c.b16 %v756, %v752
    %v965 = vpack.c.b16 %v757, %v753
    %v966 = vpack.c.b16 %v758, %v754
    %v967 = vpack.c.b16 %v759, %v755
    %v968 = vpack.c.b16 %v764, %v760
    %v969 = vpack.c.b16 %v765, %v761
    %v970 = vpack.c.b16 %v766, %v762
    %v971 = vpack.c.b16 %v767, %v763
    %v972 = vpack.c.b16 %v772, %v768
    %v973 = vpack.c.b16 %v773, %v769
    %v974 = vpack.c.b16 %v774, %v770
    %v975 = vpack.c.b16 %v775, %v771
    %v976 = vpack.c.b16 %v780, %v776
    %v977 = vpack.c.b16 %v781, %v777
    %v978 = vpack.c.b16 %v782, %v778
    %v979 = vpack.c.b16 %v783, %v779
    %v980 = vpack.c.b16 %v788, %v784
    %v981 = vpack.c.b16 %v789, %v785
    %v982 = vpack.c.b16 %v790, %v786
    %v983 = vpack.c.b16 %v791, %v787
    %v984 = vpack.c.b16 %v796, %v792
    %v985 = vpack.c.b16 %v797, %v793
    %v986 = vpack.c.b16 %v798, %v794
    %v987 = vpack.c.b16 %v799, %v795
    %v988 = vpack.c.b16 %v804, %v800
    %v989 = vpack.c.b16 %v805, %v801
    %v990 = vpack.c.b16 %v806, %v802
    %v991 = vpack.c.b16 %v807, %v803
    %v992 = vpack.c.b16 %v812, %v808
    %v993 = vpack.c.b16 %v813, %v809
    %v994 = vpack.c.b16 %v814, %v810
    %v995 = vpack.c.b16 %v815, %v811
    %v996 = vpack.c.b16 %v820, %v816
    %v997 = vpack.c.b16 %v821, %v817
    %v998 = vpack.c.b16 %v822, %v818
    %v999 = vpack.c.b16 %v823, %v819
    %v1000 = vpack.c.b16 %v828, %v824
    %v1001 = vpack.c.b16 %v829, %v825
    %v1002 = vpack.c.b16 %v830, %v826
    %v1003 = vpack.c.b16 %v831, %v827
    %v1004 = vpack.c.b16 %v836, %v832
    %v1005 = vpack.c.b16 %v837, %v833
    %v1006 = vpack.c.b16 %v838, %v834
    %v1007 = vpack.c.b16 %v839, %v835
    %v1008 = vpack.c.b16 %v844, %v840
    %v1009 = vpack.c.b16 %v845, %v841
    %v1010 = vpack.c.b16 %v846, %v842
    %v1011 = vpack.c.b16 %v847, %v843
    %v1012 = vpack.c.b16 %v852, %v848
    %v1013 = vpack.c.b16 %v853, %v849
    %v1014 = vpack.c.b16 %v854, %v850
    %v1015 = vpack.c.b16 %v855, %v851
    %v1016 = vpack.c.b16 %v860, %v856
    %v1017 = vpack.c.b16 %v861, %v857
    %v1018 = vpack.c.b16 %v862, %v858
    %v1019 = vpack.c.b16 %v863, %v859
    %v1020 = vpack.c.b16 %v868, %v864
    %v1021 = vpack.c.b16 %v869, %v865
    %v1022 = vpack.c.b16 %v870, %v866
    %v1023 = vpack.c.b16 %v871, %v867
    %v1024 = vpack.c.b16 %v876, %v872
    %v1025 = vpack.c.b16 %v877, %v873
    %v1026 = vpack.c.b16 %v878, %v874
    %v1027 = vpack.c.b16 %v879, %v875
    %v1028 = vpack.c.b16 %v884, %v880
    %v1029 = vpack.c.b16 %v885, %v881
    %v1030 = vpack.c.b16 %v886, %v882
    %v1031 = vpack.c.b16 %v887, %v883
    %v1032 = vpack.c.b16 %v892, %v888
    %v1033 = vpack.c.b16 %v893, %v889
    %v1034 = vpack.c.b16 %v894, %v890
    %v1035 = vpack.c.b16 %v895, %v891
    %v1036 = vpack.c.b16 %v900, %v896
    %v1037 = vpack.c.b16 %v901, %v897
    %v1038 = vpack.c.b16 %v902, %v898
    %v1039 = vpack.c.b16 %v903, %v899
    %v1040 = vpack.c.b16 %v908, %v904
    %v1041 = vpack.c.b16 %v909, %v905
    %v1042 = vpack.c.b16 %v910, %v906
    %v1043 = vpack.c.b16 %v911, %v907
    %v1044 = vpack.c.b16 %v916, %v912
    %v1045 = vpack.c.b16 %v917, %v913
    %v1046 = vpack.c.b16 %v918, %v914
    %v1047 = vpack.c.b16 %v919, %v915
    %1176 = vmatprep.subr.bf16.mxu0 %v921
    %1177 = vmatpush1.bf16.msra.mxu0 %v920
    %1178 = vmatprep.subr.bf16.mxu0 %v925
    %1179 = vmatpush1.bf16.msra.mxu0 %v924
    %1180 = vmatprep.subr.bf16.mxu0 %v929
    %1181 = vmatpush1.bf16.msra.mxu0 %v928
    %1182 = vmatprep.subr.bf16.mxu0 %v933
    %1183 = vmatpush1.bf16.msra.mxu0 %v932
    %1184 = vmatprep.subr.bf16.mxu0 %v937
    %1185 = vmatpush1.bf16.msra.mxu0 %v936
    %1186 = vmatprep.subr.bf16.mxu0 %v941
    %1187 = vmatpush1.bf16.msra.mxu0 %v940
    %1188 = vmatprep.subr.bf16.mxu0 %v945
    %1189 = vmatpush1.bf16.msra.mxu0 %v944
    %1190 = vmatprep.subr.bf16.mxu0 %v949
    %1191 = vmatpush1.bf16.msra.mxu0 %v948
    %1192 = vmatprep.subr.bf16.mxu0 %v953
    %1193 = vmatpush1.bf16.msra.mxu0 %v952
    %1194 = vmatprep.subr.bf16.mxu0 %v957
    %1195 = vmatpush1.bf16.msra.mxu0 %v956
    %1196 = vmatprep.subr.bf16.mxu0 %v961
    %1197 = vmatpush1.bf16.msra.mxu0 %v960
    %1198 = vmatprep.subr.bf16.mxu0 %v965
    %1199 = vmatpush1.bf16.msra.mxu0 %v964
    %1200 = vmatprep.subr.bf16.mxu0 %v969
    %1201 = vmatpush1.bf16.msra.mxu0 %v968
    %1202 = vmatprep.subr.bf16.mxu0 %v973
    %1203 = vmatpush1.bf16.msra.mxu0 %v972
    %1204 = vmatprep.subr.bf16.mxu0 %v977
    %1205 = vmatpush1.bf16.msra.mxu0 %v976
    %1206 = vmatprep.subr.bf16.mxu0 %v981
    %1207 = vmatpush1.bf16.msra.mxu0 %v980
    %1208 = vmatprep.mubr.bf16.mxu0 %v383
    %1209 = vmatmul.mubr.bf16.gmra.mrb[0].mxu0 %v382
    %v1210 = vpop.f32.mrb[0].mxu0
    %v1211 = vadd.f32 %v519, %v1210
    %v1212 = vpop.f32.mrb[0].mxu0
    %v1213 = vadd.f32 %v523, %v1212
    %v1214 = vpop.f32.mrb[0].mxu0
    %v1215 = vpop.f32.mrb[0].mxu0
    %1216 = vdwg.mxu0
    %1217 = vmatprep.subr.bf16.mxu0 %v985
    %1218 = vmatpush1.bf16.msra.mxu0 %v984
    %1219 = vmatprep.subr.bf16.mxu0 %v989
    %1220 = vmatpush1.bf16.msra.mxu0 %v988
    %1221 = vmatprep.subr.bf16.mxu0 %v993
    %1222 = vmatpush1.bf16.msra.mxu0 %v992
    %1223 = vmatprep.subr.bf16.mxu0 %v997
    %1224 = vmatpush1.bf16.msra.mxu0 %v996
    %1225 = vmatprep.subr.bf16.mxu0 %v1001
    %1226 = vmatpush1.bf16.msra.mxu0 %v1000
    %1227 = vmatprep.subr.bf16.mxu0 %v1005
    %1228 = vmatpush1.bf16.msra.mxu0 %v1004
    %1229 = vmatprep.subr.bf16.mxu0 %v1009
    %1230 = vmatpush1.bf16.msra.mxu0 %v1008
    %1231 = vmatprep.subr.bf16.mxu0 %v1013
    %1232 = vmatpush1.bf16.msra.mxu0 %v1012
    %1233 = vmatprep.subr.bf16.mxu0 %v1017
    %1234 = vmatpush1.bf16.msra.mxu0 %v1016
    %1235 = vmatprep.subr.bf16.mxu0 %v1021
    %1236 = vmatpush1.bf16.msra.mxu0 %v1020
    %1237 = vmatprep.subr.bf16.mxu0 %v1025
    %1238 = vmatpush1.bf16.msra.mxu0 %v1024
    %1239 = vmatprep.subr.bf16.mxu0 %v1029
    %1240 = vmatpush1.bf16.msra.mxu0 %v1028
    %1241 = vmatprep.subr.bf16.mxu0 %v1033
    %1242 = vmatpush1.bf16.msra.mxu0 %v1032
    %1243 = vmatprep.subr.bf16.mxu0 %v1037
    %1244 = vmatpush1.bf16.msra.mxu0 %v1036
    %1245 = vmatprep.subr.bf16.mxu0 %v1041
    %1246 = vmatpush1.bf16.msra.mxu0 %v1040
    %1247 = vmatprep.subr.bf16.mxu0 %v1045
    %1248 = vmatpush1.bf16.msra.mxu0 %v1044
    %1249 = vmatprep.mubr.bf16.mxu0 %v385
    %1250 = vmatmul.mubr.bf16.gmra.mrb[0].mxu0 %v384
    %v1251 = vpop.f32.mrb[0].mxu0
    %v1252 = vadd.f32 %v1211, %v1251
    %v1253 = vpop.f32.mrb[0].mxu0
    %v1254 = vadd.f32 %v1213, %v1253
    %v1255 = vpop.f32.mrb[0].mxu0
    %v1256 = vpop.f32.mrb[0].mxu0
    %1257 = vdwg.mxu0
    %1258 = vmatprep.subr.bf16.mxu0 %v923
    %1259 = vmatpush1.bf16.msra.mxu0 %v922
    %1260 = vmatprep.subr.bf16.mxu0 %v927
    %1261 = vmatpush1.bf16.msra.mxu0 %v926
    %1262 = vmatprep.subr.bf16.mxu0 %v931
    %1263 = vmatpush1.bf16.msra.mxu0 %v930
    %1264 = vmatprep.subr.bf16.mxu0 %v935
    %1265 = vmatpush1.bf16.msra.mxu0 %v934
    %1266 = vmatprep.subr.bf16.mxu0 %v939
    %1267 = vmatpush1.bf16.msra.mxu0 %v938
    %1268 = vmatprep.subr.bf16.mxu0 %v943
    %1269 = vmatpush1.bf16.msra.mxu0 %v942
    %1270 = vmatprep.subr.bf16.mxu0 %v947
    %1271 = vmatpush1.bf16.msra.mxu0 %v946
    %1272 = vmatprep.subr.bf16.mxu0 %v951
    %1273 = vmatpush1.bf16.msra.mxu0 %v950
    %1274 = vmatprep.subr.bf16.mxu0 %v955
    %1275 = vmatpush1.bf16.msra.mxu0 %v954
    %1276 = vmatprep.subr.bf16.mxu0 %v959
    %1277 = vmatpush1.bf16.msra.mxu0 %v958
    %1278 = vmatprep.subr.bf16.mxu0 %v963
    %1279 = vmatpush1.bf16.msra.mxu0 %v962
    %1280 = vmatprep.subr.bf16.mxu0 %v967
    %1281 = vmatpush1.bf16.msra.mxu0 %v966
    %1282 = vmatprep.subr.bf16.mxu0 %v971
    %1283 = vmatpush1.bf16.msra.mxu0 %v970
    %1284 = vmatprep.subr.bf16.mxu0 %v975
    %1285 = vmatpush1.bf16.msra.mxu0 %v974
    %1286 = vmatprep.subr.bf16.mxu0 %v979
    %1287 = vmatpush1.bf16.msra.mxu0 %v978
    %1288 = vmatprep.subr.bf16.mxu0 %v983
    %1289 = vmatpush1.bf16.msra.mxu0 %v982
    %1290 = vmatprep.mubr.bf16.mxu0 %v383
    %1291 = vmatmul.mubr.bf16.gmra.mrb[0].mxu0 %v382
    %v1292 = vpop.f32.mrb[0].mxu0
    %v1293 = vadd.f32 %v527, %v1292
    %v1294 = vpop.f32.mrb[0].mxu0
    %v1295 = vadd.f32 %v531, %v1294
    %v1296 = vpop.f32.mrb[0].mxu0
    %v1297 = vpop.f32.mrb[0].mxu0
    %1298 = vdwg.mxu0
    %1299 = vmatprep.subr.bf16.mxu0 %v987
    %1300 = vmatpush1.bf16.msra.mxu0 %v986
    %1301 = vmatprep.subr.bf16.mxu0 %v991
    %1302 = vmatpush1.bf16.msra.mxu0 %v990
    %1303 = vmatprep.subr.bf16.mxu0 %v995
    %1304 = vmatpush1.bf16.msra.mxu0 %v994
    %1305 = vmatprep.subr.bf16.mxu0 %v999
    %1306 = vmatpush1.bf16.msra.mxu0 %v998
    %1307 = vmatprep.subr.bf16.mxu0 %v1003
    %1308 = vmatpush1.bf16.msra.mxu0 %v1002
    %1309 = vmatprep.subr.bf16.mxu0 %v1007
    %1310 = vmatpush1.bf16.msra.mxu0 %v1006
    %1311 = vmatprep.subr.bf16.mxu0 %v1011
    %1312 = vmatpush1.bf16.msra.mxu0 %v1010
    %1313 = vmatprep.subr.bf16.mxu0 %v1015
    %1314 = vmatpush1.bf16.msra.mxu0 %v1014
    %1315 = vmatprep.subr.bf16.mxu0 %v1019
    %1316 = vmatpush1.bf16.msra.mxu0 %v1018
    %1317 = vmatprep.subr.bf16.mxu0 %v1023
    %1318 = vmatpush1.bf16.msra.mxu0 %v1022
    %1319 = vmatprep.subr.bf16.mxu0 %v1027
    %1320 = vmatpush1.bf16.msra.mxu0 %v1026
    %1321 = vmatprep.subr.bf16.mxu0 %v1031
    %1322 = vmatpush1.bf16.msra.mxu0 %v1030
    %1323 = vmatprep.subr.bf16.mxu0 %v1035
    %1324 = vmatpush1.bf16.msra.mxu0 %v1034
    %1325 = vmatprep.subr.bf16.mxu0 %v1039
    %1326 = vmatpush1.bf16.msra.mxu0 %v1038
    %1327 = vmatprep.subr.bf16.mxu0 %v1043
    %1328 = vmatpush1.bf16.msra.mxu0 %v1042
    %1329 = vmatprep.subr.bf16.mxu0 %v1047
    %1330 = vmatpush1.bf16.msra.mxu0 %v1046
    %1331 = vmatprep.mubr.bf16.mxu0 %v385
    %1332 = vmatmul.mubr.bf16.gmra.mrb[0].mxu0 %v384
    %v1333 = vpop.f32.mrb[0].mxu0
    %v1334 = vadd.f32 %v1293, %v1333
    %v1335 = vpop.f32.mrb[0].mxu0
    %v1336 = vadd.f32 %v1295, %v1335
    %v1337 = vpop.f32.mrb[0].mxu0
    %v1338 = vpop.f32.mrb[0].mxu0
    %1339 = vdwg.mxu0
    %v1340 = vmax.f32 %v1252, 0.0
    %v1341 = vmax.f32 %v1254, 0.0
    %v1342 = vmax.f32 %v1334, 0.0
    %v1343 = vmax.f32 %v1336, 0.0
    %v1344 = vpack.c.bf16 %v1340, %v1340
    %v1345 = vpack.c.bf16 %v1341, %v1341
    %v1346 = vpack.c.bf16 %v1342, %v1342
    %v1347 = vpack.c.bf16 %v1343, %v1343
    %v1348 = vld [vmem:[#allocation8] sm:$0xf]
    %v1349 = vld [vmem:[#allocation8 + $0x4] sm:$0xf]
    %v1350 = vld [vmem:[#allocation8 + $0x8] sm:$0xf]
    %v1351 = vld [vmem:[#allocation8 + $0xc] sm:$0xf]
    %v1352 = vld [vmem:[#allocation8 + $0x10] sm:$0xf]
    %v1353 = vld [vmem:[#allocation8 + $0x14] sm:$0xf]
    %v1354 = vld [vmem:[#allocation8 + $0x18] sm:$0xf]
    %v1355 = vld [vmem:[#allocation8 + $0x1c] sm:$0xf]
    %v1356 = vld [vmem:[#allocation8 + $0x20] sm:$0xf]
    %v1357 = vld [vmem:[#allocation8 + $0x24] sm:$0xf]
    %v1358 = vld [vmem:[#allocation8 + $0x28] sm:$0xf]
    %v1359 = vld [vmem:[#allocation8 + $0x2c] sm:$0xf]
    %v1360 = vld [vmem:[#allocation8 + $0x30] sm:$0xf]
    %v1361 = vld [vmem:[#allocation8 + $0x34] sm:$0xf]
    %v1362 = vld [vmem:[#allocation8 + $0x38] sm:$0xf]
    %v1363 = vld [vmem:[#allocation8 + $0x3c] sm:$0xf]
    %v1364 = vld [vmem:[#allocation8 + $0x40] sm:$0xf]
    %v1365 = vld [vmem:[#allocation8 + $0x44] sm:$0xf]
    %v1366 = vld [vmem:[#allocation8 + $0x48] sm:$0xf]
    %v1367 = vld [vmem:[#allocation8 + $0x4c] sm:$0xf]
    %v1368 = vld [vmem:[#allocation8 + $0x50] sm:$0xf]
    %v1369 = vld [vmem:[#allocation8 + $0x54] sm:$0xf]
    %v1370 = vld [vmem:[#allocation8 + $0x58] sm:$0xf]
    %v1371 = vld [vmem:[#allocation8 + $0x5c] sm:$0xf]
    %v1372 = vld [vmem:[#allocation8 + $0x60] sm:$0xf]
    %v1373 = vld [vmem:[#allocation8 + $0x64] sm:$0xf]
    %v1374 = vld [vmem:[#allocation8 + $0x68] sm:$0xf]
    %v1375 = vld [vmem:[#allocation8 + $0x6c] sm:$0xf]
    %v1376 = vld [vmem:[#allocation8 + $0x70] sm:$0xf]
    %v1377 = vld [vmem:[#allocation8 + $0x74] sm:$0xf]
    %v1378 = vld [vmem:[#allocation8 + $0x78] sm:$0xf]
    %v1379 = vld [vmem:[#allocation8 + $0x7c] sm:$0xf]
    %v1380 = vld [vmem:[#allocation8 + $0x80] sm:$0xf]
    %v1381 = vld [vmem:[#allocation8 + $0x84] sm:$0xf]
    %v1382 = vld [vmem:[#allocation8 + $0x88] sm:$0xf]
    %v1383 = vld [vmem:[#allocation8 + $0x8c] sm:$0xf]
    %v1384 = vld [vmem:[#allocation8 + $0x90] sm:$0xf]
    %v1385 = vld [vmem:[#allocation8 + $0x94] sm:$0xf]
    %v1386 = vld [vmem:[#allocation8 + $0x98] sm:$0xf]
    %v1387 = vld [vmem:[#allocation8 + $0x9c] sm:$0xf]
    %v1388 = vld [vmem:[#allocation8 + $0xa0] sm:$0xf]
    %v1389 = vld [vmem:[#allocation8 + $0xa4] sm:$0xf]
    %v1390 = vld [vmem:[#allocation8 + $0xa8] sm:$0xf]
    %v1391 = vld [vmem:[#allocation8 + $0xac] sm:$0xf]
    %v1392 = vld [vmem:[#allocation8 + $0xb0] sm:$0xf]
    %v1393 = vld [vmem:[#allocation8 + $0xb4] sm:$0xf]
    %v1394 = vld [vmem:[#allocation8 + $0xb8] sm:$0xf]
    %v1395 = vld [vmem:[#allocation8 + $0xbc] sm:$0xf]
    %v1396 = vld [vmem:[#allocation8 + $0xc0] sm:$0xf]
    %v1397 = vld [vmem:[#allocation8 + $0xc4] sm:$0xf]
    %v1398 = vld [vmem:[#allocation8 + $0xc8] sm:$0xf]
    %v1399 = vld [vmem:[#allocation8 + $0xcc] sm:$0xf]
    %v1400 = vld [vmem:[#allocation8 + $0xd0] sm:$0xf]
    %v1401 = vld [vmem:[#allocation8 + $0xd4] sm:$0xf]
    %v1402 = vld [vmem:[#allocation8 + $0xd8] sm:$0xf]
    %v1403 = vld [vmem:[#allocation8 + $0xdc] sm:$0xf]
    %v1404 = vld [vmem:[#allocation8 + $0xe0] sm:$0xf]
    %v1405 = vld [vmem:[#allocation8 + $0xe4] sm:$0xf]
    %v1406 = vld [vmem:[#allocation8 + $0xe8] sm:$0xf]
    %v1407 = vld [vmem:[#allocation8 + $0xec] sm:$0xf]
    %v1408 = vld [vmem:[#allocation8 + $0xf0] sm:$0xf]
    %v1409 = vld [vmem:[#allocation8 + $0xf4] sm:$0xf]
    %v1410 = vld [vmem:[#allocation8 + $0xf8] sm:$0xf]
    %v1411 = vld [vmem:[#allocation8 + $0xfc] sm:$0xf]
    %v1412 = vld [vmem:[%s6] sm:$0x1]
    %v1414 = vlaneseq
    %v1415 = vshrl.u32 %v1414, 7
    %v1416 = vsub.s32 0, %v1415
    %v1417 = vrot.slane %v1412, %v1416
    %v1483 = vunpack.c.l.b16 %v1348
    %v1484 = vunpack.c.l.b16 %v1349
    %v1485 = vunpack.c.l.b16 %v1350
    %v1486 = vunpack.c.l.b16 %v1351
    %v1487 = vunpack.c.l.b16 %v1352
    %v1488 = vunpack.c.l.b16 %v1353
    %v1489 = vunpack.c.l.b16 %v1354
    %v1490 = vunpack.c.l.b16 %v1355
    %v1491 = vunpack.c.l.b16 %v1356
    %v1492 = vunpack.c.l.b16 %v1357
    %v1493 = vunpack.c.l.b16 %v1358
    %v1494 = vunpack.c.l.b16 %v1359
    %v1495 = vunpack.c.l.b16 %v1360
    %v1496 = vunpack.c.l.b16 %v1361
    %v1497 = vunpack.c.l.b16 %v1362
    %v1498 = vunpack.c.l.b16 %v1363
    %v1499 = vunpack.c.l.b16 %v1364
    %v1500 = vunpack.c.l.b16 %v1365
    %v1501 = vunpack.c.l.b16 %v1366
    %v1502 = vunpack.c.l.b16 %v1367
    %v1503 = vunpack.c.l.b16 %v1368
    %v1504 = vunpack.c.l.b16 %v1369
    %v1505 = vunpack.c.l.b16 %v1370
    %v1506 = vunpack.c.l.b16 %v1371
    %v1507 = vunpack.c.l.b16 %v1372
    %v1508 = vunpack.c.l.b16 %v1373
    %v1509 = vunpack.c.l.b16 %v1374
    %v1510 = vunpack.c.l.b16 %v1375
    %v1511 = vunpack.c.l.b16 %v1376
    %v1512 = vunpack.c.l.b16 %v1377
    %v1513 = vunpack.c.l.b16 %v1378
    %v1514 = vunpack.c.l.b16 %v1379
    %v1515 = vunpack.c.l.b16 %v1380
    %v1516 = vunpack.c.l.b16 %v1381
    %v1517 = vunpack.c.l.b16 %v1382
    %v1518 = vunpack.c.l.b16 %v1383
    %v1519 = vunpack.c.l.b16 %v1384
    %v1520 = vunpack.c.l.b16 %v1385
    %v1521 = vunpack.c.l.b16 %v1386
    %v1522 = vunpack.c.l.b16 %v1387
    %v1523 = vunpack.c.l.b16 %v1388
    %v1524 = vunpack.c.l.b16 %v1389
    %v1525 = vunpack.c.l.b16 %v1390
    %v1526 = vunpack.c.l.b16 %v1391
    %v1527 = vunpack.c.l.b16 %v1392
    %v1528 = vunpack.c.l.b16 %v1393
    %v1529 = vunpack.c.l.b16 %v1394
    %v1530 = vunpack.c.l.b16 %v1395
    %v1531 = vunpack.c.l.b16 %v1396
    %v1532 = vunpack.c.l.b16 %v1397
    %v1533 = vunpack.c.l.b16 %v1398
    %v1534 = vunpack.c.l.b16 %v1399
    %v1535 = vunpack.c.l.b16 %v1400
    %v1536 = vunpack.c.l.b16 %v1401
    %v1537 = vunpack.c.l.b16 %v1402
    %v1538 = vunpack.c.l.b16 %v1403
    %v1539 = vunpack.c.l.b16 %v1404
    %v1540 = vunpack.c.l.b16 %v1405
    %v1541 = vunpack.c.l.b16 %v1406
    %v1542 = vunpack.c.l.b16 %v1407
    %v1543 = vunpack.c.l.b16 %v1408
    %v1544 = vunpack.c.l.b16 %v1409
    %v1545 = vunpack.c.l.b16 %v1410
    %v1546 = vunpack.c.l.b16 %v1411
    %v1547 = vpack.c.b16 %v1484, %v1483
    %v1548 = vpack.c.b16 %v1486, %v1485
    %v1549 = vpack.c.b16 %v1488, %v1487
    %v1550 = vpack.c.b16 %v1490, %v1489
    %v1551 = vpack.c.b16 %v1492, %v1491
    %v1552 = vpack.c.b16 %v1494, %v1493
    %v1553 = vpack.c.b16 %v1496, %v1495
    %v1554 = vpack.c.b16 %v1498, %v1497
    %v1555 = vpack.c.b16 %v1500, %v1499
    %v1556 = vpack.c.b16 %v1502, %v1501
    %v1557 = vpack.c.b16 %v1504, %v1503
    %v1558 = vpack.c.b16 %v1506, %v1505
    %v1559 = vpack.c.b16 %v1508, %v1507
    %v1560 = vpack.c.b16 %v1510, %v1509
    %v1561 = vpack.c.b16 %v1512, %v1511
    %v1562 = vpack.c.b16 %v1514, %v1513
    %v1563 = vpack.c.b16 %v1516, %v1515
    %v1564 = vpack.c.b16 %v1518, %v1517
    %v1565 = vpack.c.b16 %v1520, %v1519
    %v1566 = vpack.c.b16 %v1522, %v1521
    %v1567 = vpack.c.b16 %v1524, %v1523
    %v1568 = vpack.c.b16 %v1526, %v1525
    %v1569 = vpack.c.b16 %v1528, %v1527
    %v1570 = vpack.c.b16 %v1530, %v1529
    %v1571 = vpack.c.b16 %v1532, %v1531
    %v1572 = vpack.c.b16 %v1534, %v1533
    %v1573 = vpack.c.b16 %v1536, %v1535
    %v1574 = vpack.c.b16 %v1538, %v1537
    %v1575 = vpack.c.b16 %v1540, %v1539
    %v1576 = vpack.c.b16 %v1542, %v1541
    %v1577 = vpack.c.b16 %v1544, %v1543
    %v1578 = vpack.c.b16 %v1546, %v1545
    %1611 = vmatprep.subr.bf16.mxu0 0
    %1612 = vmatpush1.bf16.msra.mxu0 %v1547
    %1613 = vmatprep.subr.bf16.mxu0 0
    %1614 = vmatpush1.bf16.msra.mxu0 %v1548
    %1615 = vmatprep.subr.bf16.mxu0 0
    %1616 = vmatpush1.bf16.msra.mxu0 %v1549
    %1617 = vmatprep.subr.bf16.mxu0 0
    %1618 = vmatpush1.bf16.msra.mxu0 %v1550
    %1619 = vmatprep.subr.bf16.mxu0 0
    %1620 = vmatpush1.bf16.msra.mxu0 %v1551
    %1621 = vmatprep.subr.bf16.mxu0 0
    %1622 = vmatpush1.bf16.msra.mxu0 %v1552
    %1623 = vmatprep.subr.bf16.mxu0 0
    %1624 = vmatpush1.bf16.msra.mxu0 %v1553
    %1625 = vmatprep.subr.bf16.mxu0 0
    %1626 = vmatpush1.bf16.msra.mxu0 %v1554
    %1627 = vmatprep.subr.bf16.mxu0 0
    %1628 = vmatpush1.bf16.msra.mxu0 %v1555
    %1629 = vmatprep.subr.bf16.mxu0 0
    %1630 = vmatpush1.bf16.msra.mxu0 %v1556
    %1631 = vmatprep.subr.bf16.mxu0 0
    %1632 = vmatpush1.bf16.msra.mxu0 %v1557
    %1633 = vmatprep.subr.bf16.mxu0 0
    %1634 = vmatpush1.bf16.msra.mxu0 %v1558
    %1635 = vmatprep.subr.bf16.mxu0 0
    %1636 = vmatpush1.bf16.msra.mxu0 %v1559
    %1637 = vmatprep.subr.bf16.mxu0 0
    %1638 = vmatpush1.bf16.msra.mxu0 %v1560
    %1639 = vmatprep.subr.bf16.mxu0 0
    %1640 = vmatpush1.bf16.msra.mxu0 %v1561
    %1641 = vmatprep.subr.bf16.mxu0 0
    %1642 = vmatpush1.bf16.msra.mxu0 %v1562
    %1643 = vmatprep.mubr.bf16.mxu0 %v1345
    %1644 = vmatmul.mubr.bf16.gmra.mrb[0].mxu0 %v1344
    %v1645 = vpop.f32.mrb[0].mxu0
    %v1646 = vadd.f32 %v1417, %v1645
    %v1647 = vpop.f32.mrb[0].mxu0
    %v1648 = vpop.f32.mrb[0].mxu0
    %v1649 = vpop.f32.mrb[0].mxu0
    %1650 = vdwg.mxu0
    %1651 = vmatprep.subr.bf16.mxu0 0
    %1652 = vmatpush1.bf16.msra.mxu0 %v1563
    %1653 = vmatprep.subr.bf16.mxu0 0
    %1654 = vmatpush1.bf16.msra.mxu0 %v1564
    %1655 = vmatprep.subr.bf16.mxu0 0
    %1656 = vmatpush1.bf16.msra.mxu0 %v1565
    %1657 = vmatprep.subr.bf16.mxu0 0
    %1658 = vmatpush1.bf16.msra.mxu0 %v1566
    %1659 = vmatprep.subr.bf16.mxu0 0
    %1660 = vmatpush1.bf16.msra.mxu0 %v1567
    %1661 = vmatprep.subr.bf16.mxu0 0
    %1662 = vmatpush1.bf16.msra.mxu0 %v1568
    %1663 = vmatprep.subr.bf16.mxu0 0
    %1664 = vmatpush1.bf16.msra.mxu0 %v1569
    %1665 = vmatprep.subr.bf16.mxu0 0
    %1666 = vmatpush1.bf16.msra.mxu0 %v1570
    %1667 = vmatprep.subr.bf16.mxu0 0
    %1668 = vmatpush1.bf16.msra.mxu0 %v1571
    %1669 = vmatprep.subr.bf16.mxu0 0
    %1670 = vmatpush1.bf16.msra.mxu0 %v1572
    %1671 = vmatprep.subr.bf16.mxu0 0
    %1672 = vmatpush1.bf16.msra.mxu0 %v1573
    %1673 = vmatprep.subr.bf16.mxu0 0
    %1674 = vmatpush1.bf16.msra.mxu0 %v1574
    %1675 = vmatprep.subr.bf16.mxu0 0
    %1676 = vmatpush1.bf16.msra.mxu0 %v1575
    %1677 = vmatprep.subr.bf16.mxu0 0
    %1678 = vmatpush1.bf16.msra.mxu0 %v1576
    %1679 = vmatprep.subr.bf16.mxu0 0
    %1680 = vmatpush1.bf16.msra.mxu0 %v1577
    %1681 = vmatprep.subr.bf16.mxu0 0
    %1682 = vmatpush1.bf16.msra.mxu0 %v1578
    %1683 = vmatprep.mubr.bf16.mxu0 %v1347
    %1684 = vmatmul.mubr.bf16.gmra.mrb[0].mxu0 %v1346
    %v1685 = vpop.f32.mrb[0].mxu0
    %v1686 = vadd.f32 %v1646, %v1685
    %v1687 = vpop.f32.mrb[0].mxu0
    %v1688 = vpop.f32.mrb[0].mxu0
    %v1689 = vpop.f32.mrb[0].mxu0
    %1690 = vdwg.mxu0
    %1691 = vst [vmem:[#allocation10] sm:$0xff] %v1686
    // Predicated region
    $region46: #{tpu_custom_call.1} parent=1 // pred_check
      _
    $region47: #{tpu_custom_call.1} parent=1 // pred_check_branch
      %1693 = sbr.rel (0) target = $region49
    $region48: #{tpu_custom_call.1} parent=1 // pred_region
      %s1695 = ssub.s32 128, 128
      %1696 = vsyncadd [#allocation4], %s1695
      %s1698 = sshll.u32 [#allocation10], 4
      %s1699 = int_to_ptr.vmem [resolvable:$true] %s1698
      %1701 = dma.vmem_to_hbm [thread:$0]  %s1699, 128, %s7, [#allocation4]
    $region49: #{tpu_custom_call.1} parent=1 // pred_fallthru
      _
    // Predicated region
    $region50: #{tpu_custom_call.1} parent=1 // pred_check
      _
    $region51: #{tpu_custom_call.1} parent=1 // pred_check_branch
      %1703 = sbr.rel (0) target = $region53
    $region52: #{tpu_custom_call.1} parent=1 // pred_region
      %1704 = dma.done [#allocation4], 128
    $region53: #{tpu_custom_call.1} parent=1 // pred_fallthru
      _
    %1705 = vsyncpa [#allocation3], 1
    %1706 = vsyncpa [#allocation6], 1
    %1707 = vsyncpa [#allocation9], 1
    %1708 = vsyncpa [#allocation4], 1

</llo_original>
